<compile_context>
chip_gen: v7x
topology: tpu7x:2x2x1
jax: 0.10.0
libtpu: 0.0.40
codegen_flags: <defaults>
</compile_context>

<pallas_src>
import math

import jax
import jax.numpy as jnp
from jax import lax
from jax.experimental import pallas as pl
from jax.experimental.pallas import tpu as pltpu  # noqa: F401

# ---- model dims (small, consistent with a TransformerEncoderLayer) ----
SEQ = 8        # S
BATCH = 2      # B  (power of two for the XOR batch-parity trick below)
EMBED = 32     # E (d_model)
NHEAD = 4
HEAD = EMBED // NHEAD
FFN = 64       # dim_feedforward
LN_EPS = 1e-5
SB = SEQ * BATCH


def _layernorm(x, g, b, eps=LN_EPS):
    mu = jnp.mean(x, axis=-1, keepdims=True)
    var = jnp.mean((x - mu) ** 2, axis=-1, keepdims=True)
    return (x - mu) * lax.rsqrt(var + eps) * g + b


def _tenc_kernel(src_ref, mask_ref, w_attn_ref, w1_ref, w2_ref, consts_ref, out_ref):
    # src_ref: (S*B, E), row r corresponds to (s = r // B, b = r % B).
    x = src_ref[...]                                              # (SB, E) f32

    c = consts_ref[...]                                           # (3, 128) packed consts
    b_qkvo = c[0:1, :]                                            # [bq|bk|bv|bo]
    b_o = c[0:1, 3 * EMBED:4 * EMBED]
    b_1 = c[1:2, 0:FFN]
    b_2 = c[1:2, FFN:FFN + EMBED]
    ln1g = c[2:3, 0:EMBED]
    ln1b = c[2:3, EMBED:2 * EMBED]
    ln2g = c[2:3, 2 * EMBED:3 * EMBED]
    ln2b = c[2:3, 3 * EMBED:4 * EMBED]

    # ---- fused QKV projection (one full 128-lane MXU push; x@Wo cols discarded) ----
    W = w_attn_ref[...]                                           # (E, 4E) = [Wq|Wk|Wv|Wo]
    qkvo = jnp.dot(x, W, preferred_element_type=jnp.float32) + b_qkvo
    scale = 1.0 / math.sqrt(HEAD)
    q = qkvo[:, 0:EMBED] * scale                                  # fold score scale into q once
    k = qkvo[:, EMBED:2 * EMBED]
    v = qkvo[:, 2 * EMBED:3 * EMBED]

    # ---- additive bias forbidding cross-batch attention ----
    # row r belongs to batch (r mod B); for power-of-two B, equality of the low
    # log2(B) bits <=> ((r ^ c) & (B-1)) == 0.  Computed once, reused per head.
    r_idx = lax.broadcasted_iota(jnp.int32, (SB, SB), 0)
    c_idx = lax.broadcasted_iota(jnp.int32, (SB, SB), 1)
    same_batch = ((r_idx ^ c_idx) & (BATCH - 1)) == 0
    neg = jnp.where(same_batch, jnp.float32(0.0), jnp.float32(-1e30))

    # ---- multi-head self-attention (both batches per head; static unroll) ----
    head_outs = []
    for h in range(NHEAD):
        lo, hi = h * HEAD, (h + 1) * HEAD
        qh, kh, vh = q[:, lo:hi], k[:, lo:hi], v[:, lo:hi]
        s = jnp.dot(qh, kh.T, preferred_element_type=jnp.float32) + neg
        s = s - jnp.max(s, axis=-1, keepdims=True)
        p = jnp.exp(s)
        p = p * pl.reciprocal(jnp.sum(p, axis=-1, keepdims=True), approx=True)
        head_outs.append(jnp.dot(p, vh, preferred_element_type=jnp.float32))
    attn = jnp.concatenate(head_outs, axis=-1)                    # (SB, E)
    attn = jnp.dot(attn, W[:, 3 * EMBED:4 * EMBED],
                   preferred_element_type=jnp.float32) + b_o

    # ---- residual + norm1 ----
    y = _layernorm(x + attn, ln1g, ln1b)

    # ---- feed-forward (ReLU) for both batches at once ----
    h1 = jnp.maximum(
        jnp.dot(y, w1_ref[...], preferred_element_type=jnp.float32) + b_1, 0.0)
    ff = jnp.dot(h1, w2_ref[...], preferred_element_type=jnp.float32) + b_2

    # ---- residual + norm2 ----
    z = _layernorm(y + ff, ln2g, ln2b)

    # ---- pruning mask (already replicated per batch row) ----
    out_ref[...] = (z * mask_ref[...]).astype(out_ref.dtype)


def pack_params(params):
    """Pack the 16 per-layer tensors into 4 kernel inputs."""
    (wq, wk, wv, bq, bk, bv, wo, bo, ln1g, ln1b, w1, b1, w2, b2, ln2g, ln2b) = params
    w_attn = jnp.concatenate([wq, wk, wv, wo], axis=1)            # (E, 4E) lane-dense
    row0 = jnp.concatenate([bq, bk, bv, bo], axis=1)              # (1, 128)
    pad = jnp.zeros((1, 4 * EMBED - FFN - EMBED), jnp.float32)
    row1 = jnp.concatenate([b1, b2, pad], axis=1)                 # (1, 128)
    row2 = jnp.concatenate([ln1g, ln1b, ln2g, ln2b], axis=1)      # (1, 128)
    consts = jnp.concatenate([row0, row1, row2], axis=0)          # (3, 128)
    return (w_attn, w1, w2, consts)


@jax.jit
def masked_tenc_layer(src_sbe, mask, packed):
    """src_sbe: (S, B, E) float32 (PyTorch layout); mask: (S, E); returns (S, B, E)."""
    S, B, E = src_sbe.shape
    # Contiguous collapses/expansions only — no transposes, no data movement.
    src2d = src_sbe.reshape(S * B, E)                             # row r = s*B + b
    mask_rep = jnp.repeat(mask, B, axis=0)                        # row r -> mask[r // B]

    w_attn, w_1, w_2, consts = packed
    out2d = pl.pallas_call(
        _tenc_kernel,
        out_shape=jax.ShapeDtypeStruct((S * B, E), jnp.float32),
    )(src2d, mask_rep, w_attn, w_1, w_2, consts)

    return out2d.reshape(S, B, E)


def make_params(key):
    """Deterministic parameters matching nn.TransformerEncoderLayer(E, NHEAD, FFN).
    Linear weights are stored pre-transposed to (in, out) so the kernel does x @ W."""
    ks = jax.random.split(key, 12)

    def lin(kw, kb, fan_in, fan_out):
        bound = 1.0 / math.sqrt(fan_in)
        w = jax.random.uniform(kw, (fan_in, fan_out), jnp.float32, -bound, bound)
        b = jax.random.uniform(kb, (1, fan_out), jnp.float32, -bound, bound)
        return w, b

    wq, bq = lin(ks[0], ks[1], EMBED, EMBED)
    wk, bk = lin(ks[2], ks[3], EMBED, EMBED)
    wv, bv = lin(ks[4], ks[5], EMBED, EMBED)
    wo, bo = lin(ks[6], ks[7], EMBED, EMBED)
    w1, b1 = lin(ks[8], ks[9], EMBED, FFN)
    w2, b2 = lin(ks[10], ks[11], FFN, EMBED)
    ln1g = jnp.ones((1, EMBED), jnp.float32); ln1b = jnp.zeros((1, EMBED), jnp.float32)
    ln2g = jnp.ones((1, EMBED), jnp.float32); ln2b = jnp.zeros((1, EMBED), jnp.float32)
    return (wq, wk, wv, bq, bk, bv, wo, bo, ln1g, ln1b, w1, b1, w2, b2, ln2g, ln2b)


def reference(src_sbe, mask, params):
    """Pure-JAX reference of the same math for verification."""
    (wq, wk, wv, bq, bk, bv, wo, bo, ln1g, ln1b, w1, b1, w2, b2, ln2g, ln2b) = params
    x = jnp.transpose(src_sbe, (1, 0, 2))                         # (B, S, E)
    q = x @ wq + bq; k = x @ wk + bk; v = x @ wv + bv
    qh = q.reshape(BATCH, SEQ, NHEAD, HEAD).transpose(0, 2, 1, 3)
    kh = k.reshape(BATCH, SEQ, NHEAD, HEAD).transpose(0, 2, 1, 3)
    vh = v.reshape(BATCH, SEQ, NHEAD, HEAD).transpose(0, 2, 1, 3)
    s = jnp.einsum("bhqd,bhkd->bhqk", qh, kh) / math.sqrt(HEAD)
    p = jax.nn.softmax(s, axis=-1)
    a = jnp.einsum("bhqk,bhkd->bhqd", p, vh).transpose(0, 2, 1, 3).reshape(BATCH, SEQ, EMBED)
    a = a @ wo + bo
    y = _layernorm(x + a, ln1g, ln1b)
    ff = jnp.maximum(y @ w1 + b1, 0.0) @ w2 + b2
    z = _layernorm(y + ff, ln2g, ln2b)
    out = z * mask[None, :, :]
    return jnp.transpose(out, (1, 0, 2))


if __name__ == "__main__":
    key = jax.random.PRNGKey(0)
    k_src, k_mask, k_par = jax.random.split(key, 3)

    # src in PyTorch (S, B, E) layout; pruning mask (S, E) -> broadcast over batch
    src = jax.random.normal(k_src, (SEQ, BATCH, EMBED), jnp.float32)
    mask = (jax.random.uniform(k_mask, (SEQ, EMBED)) > 0.3).astype(jnp.float32)
    params = make_params(k_par)
    packed = pack_params(params)

    out = masked_tenc_layer(src, mask, packed)
    out = jax.block_until_ready(out)

    ref = reference(src, mask, params)
    assert out.shape == (SEQ, BATCH, EMBED)
    # tolerance relaxed slightly because the softmax denominator uses the EUP
    # approximate reciprocal (pl.reciprocal(approx=True))
    assert jnp.allclose(out, ref, atol=2e-3, rtol=2e-3), "mismatch vs reference"

    # TODO(synk): dropout layers are identity in eval mode and intentionally omitted.
    print("KERNEL_OK")
</pallas_src>

<mosaic_0001>
module attributes {stable_mosaic.version = 11 : i64} {
  func.func @_tenc_kernel(%arg0: memref<16x32xf32, #tpu.memory_space<vmem>>, %arg1: memref<16x32xf32, #tpu.memory_space<vmem>>, %arg2: memref<32x128xf32, #tpu.memory_space<vmem>>, %arg3: memref<32x64xf32, #tpu.memory_space<vmem>>, %arg4: memref<64x32xf32, #tpu.memory_space<vmem>>, %arg5: memref<3x128xf32, #tpu.memory_space<vmem>>, %arg6: memref<16x32xf32, #tpu.memory_space<vmem>>) attributes {dimension_semantics = [], scalar_prefetch = 0 : i64, scratch_operands = 0 : i64, tpu.core_type = #tpu.core_type<tc>} {
    %c0 = arith.constant 0 : index
    %c0_0 = arith.constant 0 : index
    %0 = vector.load %arg0[%c0, %c0_0] : memref<16x32xf32, #tpu.memory_space<vmem>>, vector<16x32xf32>
    %c0_1 = arith.constant 0 : index
    %c0_2 = arith.constant 0 : index
    %1 = vector.load %arg5[%c0_1, %c0_2] : memref<3x128xf32, #tpu.memory_space<vmem>>, vector<3x128xf32>
    %2 = vector.extract_strided_slice %1 {offsets = [0, 0], sizes = [1, 128], strides = [1, 1]} : vector<3x128xf32> to vector<1x128xf32>
    %3 = vector.extract_strided_slice %1 {offsets = [0, 96], sizes = [1, 32], strides = [1, 1]} : vector<3x128xf32> to vector<1x32xf32>
    %4 = vector.extract_strided_slice %1 {offsets = [1, 0], sizes = [1, 64], strides = [1, 1]} : vector<3x128xf32> to vector<1x64xf32>
    %5 = vector.extract_strided_slice %1 {offsets = [1, 64], sizes = [1, 32], strides = [1, 1]} : vector<3x128xf32> to vector<1x32xf32>
    %6 = vector.extract_strided_slice %1 {offsets = [2, 0], sizes = [1, 32], strides = [1, 1]} : vector<3x128xf32> to vector<1x32xf32>
    %7 = vector.extract_strided_slice %1 {offsets = [2, 32], sizes = [1, 32], strides = [1, 1]} : vector<3x128xf32> to vector<1x32xf32>
    %8 = vector.extract_strided_slice %1 {offsets = [2, 64], sizes = [1, 32], strides = [1, 1]} : vector<3x128xf32> to vector<1x32xf32>
    %9 = vector.extract_strided_slice %1 {offsets = [2, 96], sizes = [1, 32], strides = [1, 1]} : vector<3x128xf32> to vector<1x32xf32>
    %c0_3 = arith.constant 0 : index
    %c0_4 = arith.constant 0 : index
    %10 = vector.load %arg2[%c0_3, %c0_4] : memref<32x128xf32, #tpu.memory_space<vmem>>, vector<32x128xf32>
    %cst = arith.constant dense<0.000000e+00> : vector<16x128xf32>
    %11 = tpu.matmul %0, %10, %cst {dimension_numbers = #tpu.dot_dimension_numbers<[1], [0], [0], [1], [0, 0, 1, 1], [], []>} : vector<16x32xf32>, vector<32x128xf32>, vector<16x128xf32> -> vector<16x128xf32>
    %12 = vector.broadcast %2 : vector<1x128xf32> to vector<16x128xf32>
    %13 = arith.addf %11, %12 : vector<16x128xf32>
    %14 = vector.extract_strided_slice %13 {offsets = [0, 0], sizes = [16, 32], strides = [1, 1]} : vector<16x128xf32> to vector<16x32xf32>
    %cst_5 = arith.constant 0.353553385 : f32
    %15 = vector.broadcast %cst_5 : f32 to vector<16x32xf32>
    %16 = arith.mulf %14, %15 : vector<16x32xf32>
    %17 = vector.extract_strided_slice %13 {offsets = [0, 32], sizes = [16, 32], strides = [1, 1]} : vector<16x128xf32> to vector<16x32xf32>
    %18 = vector.extract_strided_slice %13 {offsets = [0, 64], sizes = [16, 32], strides = [1, 1]} : vector<16x128xf32> to vector<16x32xf32>
    %19 = tpu.iota {dimensions = array<i32: 0>} : vector<16x16xi32>
    %20 = tpu.iota {dimensions = array<i32: 1>} : vector<16x16xi32>
    %21 = arith.xori %19, %20 : vector<16x16xi32>
    %c1_i32 = arith.constant 1 : i32
    %22 = vector.broadcast %c1_i32 : i32 to vector<16x16xi32>
    %23 = arith.andi %21, %22 : vector<16x16xi32>
    %c0_i32 = arith.constant 0 : i32
    %24 = vector.broadcast %c0_i32 : i32 to vector<16x16xi32>
    %25 = arith.cmpi eq, %23, %24 : vector<16x16xi32>
    %cst_6 = arith.constant 0.000000e+00 : f32
    %cst_7 = arith.constant -1.000000e+30 : f32
    %26 = vector.broadcast %cst_6 : f32 to vector<16x16xf32>
    %27 = vector.broadcast %cst_7 : f32 to vector<16x16xf32>
    %28 = arith.select %25, %26, %27 : vector<16x16xi1>, vector<16x16xf32>
    %29 = vector.extract_strided_slice %16 {offsets = [0, 0], sizes = [16, 8], strides = [1, 1]} : vector<16x32xf32> to vector<16x8xf32>
    %30 = vector.extract_strided_slice %17 {offsets = [0, 0], sizes = [16, 8], strides = [1, 1]} : vector<16x32xf32> to vector<16x8xf32>
    %31 = vector.extract_strided_slice %18 {offsets = [0, 0], sizes = [16, 8], strides = [1, 1]} : vector<16x32xf32> to vector<16x8xf32>
    %32 = tpu.transpose %30, [1, 0] : vector<16x8xf32> -> vector<8x16xf32>
    %cst_8 = arith.constant dense<0.000000e+00> : vector<16x16xf32>
    %33 = tpu.matmul %29, %32, %cst_8 {dimension_numbers = #tpu.dot_dimension_numbers<[1], [0], [0], [1], [0, 0, 1, 1], [], []>} : vector<16x8xf32>, vector<8x16xf32>, vector<16x16xf32> -> vector<16x16xf32>
    %34 = arith.addf %33, %28 : vector<16x16xf32>
    %cst_9 = arith.constant dense<0xFF800000> : vector<16xf32>
    %35 = vector.multi_reduction <maximumf>, %34, %cst_9 [1] : vector<16x16xf32> to vector<16xf32>
    %36 = vector.shape_cast %35 : vector<16xf32> to vector<16x1xf32>
    %37 = vector.broadcast %36 : vector<16x1xf32> to vector<16x16xf32>
    %38 = arith.subf %34, %37 : vector<16x16xf32>
    %39 = math.exp %38 : vector<16x16xf32>
    %cst_10 = arith.constant dense<0.000000e+00> : vector<16xf32>
    %40 = vector.multi_reduction <add>, %39, %cst_10 [1] : vector<16x16xf32> to vector<16xf32>
    %41 = vector.shape_cast %40 : vector<16xf32> to vector<16x1xf32>
    %42 = tpu.reciprocal %41 {approx = true} : vector<16x1xf32> -> vector<16x1xf32>
    %43 = vector.broadcast %42 : vector<16x1xf32> to vector<16x16xf32>
    %44 = arith.mulf %39, %43 : vector<16x16xf32>
    %cst_11 = arith.constant dense<0.000000e+00> : vector<16x8xf32>
    %45 = tpu.matmul %44, %31, %cst_11 {dimension_numbers = #tpu.dot_dimension_numbers<[1], [0], [0], [1], [0, 0, 1, 1], [], []>} : vector<16x16xf32>, vector<16x8xf32>, vector<16x8xf32> -> vector<16x8xf32>
    %46 = vector.extract_strided_slice %16 {offsets = [0, 8], sizes = [16, 8], strides = [1, 1]} : vector<16x32xf32> to vector<16x8xf32>
    %47 = vector.extract_strided_slice %17 {offsets = [0, 8], sizes = [16, 8], strides = [1, 1]} : vector<16x32xf32> to vector<16x8xf32>
    %48 = vector.extract_strided_slice %18 {offsets = [0, 8], sizes = [16, 8], strides = [1, 1]} : vector<16x32xf32> to vector<16x8xf32>
    %49 = tpu.transpose %47, [1, 0] : vector<16x8xf32> -> vector<8x16xf32>
    %cst_12 = arith.constant dense<0.000000e+00> : vector<16x16xf32>
    %50 = tpu.matmul %46, %49, %cst_12 {dimension_numbers = #tpu.dot_dimension_numbers<[1], [0], [0], [1], [0, 0, 1, 1], [], []>} : vector<16x8xf32>, vector<8x16xf32>, vector<16x16xf32> -> vector<16x16xf32>
    %51 = arith.addf %50, %28 : vector<16x16xf32>
    %cst_13 = arith.constant dense<0xFF800000> : vector<16xf32>
    %52 = vector.multi_reduction <maximumf>, %51, %cst_13 [1] : vector<16x16xf32> to vector<16xf32>
    %53 = vector.shape_cast %52 : vector<16xf32> to vector<16x1xf32>
    %54 = vector.broadcast %53 : vector<16x1xf32> to vector<16x16xf32>
    %55 = arith.subf %51, %54 : vector<16x16xf32>
    %56 = math.exp %55 : vector<16x16xf32>
    %cst_14 = arith.constant dense<0.000000e+00> : vector<16xf32>
    %57 = vector.multi_reduction <add>, %56, %cst_14 [1] : vector<16x16xf32> to vector<16xf32>
    %58 = vector.shape_cast %57 : vector<16xf32> to vector<16x1xf32>
    %59 = tpu.reciprocal %58 {approx = true} : vector<16x1xf32> -> vector<16x1xf32>
    %60 = vector.broadcast %59 : vector<16x1xf32> to vector<16x16xf32>
    %61 = arith.mulf %56, %60 : vector<16x16xf32>
    %cst_15 = arith.constant dense<0.000000e+00> : vector<16x8xf32>
    %62 = tpu.matmul %61, %48, %cst_15 {dimension_numbers = #tpu.dot_dimension_numbers<[1], [0], [0], [1], [0, 0, 1, 1], [], []>} : vector<16x16xf32>, vector<16x8xf32>, vector<16x8xf32> -> vector<16x8xf32>
    %63 = vector.extract_strided_slice %16 {offsets = [0, 16], sizes = [16, 8], strides = [1, 1]} : vector<16x32xf32> to vector<16x8xf32>
    %64 = vector.extract_strided_slice %17 {offsets = [0, 16], sizes = [16, 8], strides = [1, 1]} : vector<16x32xf32> to vector<16x8xf32>
    %65 = vector.extract_strided_slice %18 {offsets = [0, 16], sizes = [16, 8], strides = [1, 1]} : vector<16x32xf32> to vector<16x8xf32>
    %66 = tpu.transpose %64, [1, 0] : vector<16x8xf32> -> vector<8x16xf32>
    %cst_16 = arith.constant dense<0.000000e+00> : vector<16x16xf32>
    %67 = tpu.matmul %63, %66, %cst_16 {dimension_numbers = #tpu.dot_dimension_numbers<[1], [0], [0], [1], [0, 0, 1, 1], [], []>} : vector<16x8xf32>, vector<8x16xf32>, vector<16x16xf32> -> vector<16x16xf32>
    %68 = arith.addf %67, %28 : vector<16x16xf32>
    %cst_17 = arith.constant dense<0xFF800000> : vector<16xf32>
    %69 = vector.multi_reduction <maximumf>, %68, %cst_17 [1] : vector<16x16xf32> to vector<16xf32>
    %70 = vector.shape_cast %69 : vector<16xf32> to vector<16x1xf32>
    %71 = vector.broadcast %70 : vector<16x1xf32> to vector<16x16xf32>
    %72 = arith.subf %68, %71 : vector<16x16xf32>
    %73 = math.exp %72 : vector<16x16xf32>
    %cst_18 = arith.constant dense<0.000000e+00> : vector<16xf32>
    %74 = vector.multi_reduction <add>, %73, %cst_18 [1] : vector<16x16xf32> to vector<16xf32>
    %75 = vector.shape_cast %74 : vector<16xf32> to vector<16x1xf32>
    %76 = tpu.reciprocal %75 {approx = true} : vector<16x1xf32> -> vector<16x1xf32>
    %77 = vector.broadcast %76 : vector<16x1xf32> to vector<16x16xf32>
    %78 = arith.mulf %73, %77 : vector<16x16xf32>
    %cst_19 = arith.constant dense<0.000000e+00> : vector<16x8xf32>
    %79 = tpu.matmul %78, %65, %cst_19 {dimension_numbers = #tpu.dot_dimension_numbers<[1], [0], [0], [1], [0, 0, 1, 1], [], []>} : vector<16x16xf32>, vector<16x8xf32>, vector<16x8xf32> -> vector<16x8xf32>
    %80 = vector.extract_strided_slice %16 {offsets = [0, 24], sizes = [16, 8], strides = [1, 1]} : vector<16x32xf32> to vector<16x8xf32>
    %81 = vector.extract_strided_slice %17 {offsets = [0, 24], sizes = [16, 8], strides = [1, 1]} : vector<16x32xf32> to vector<16x8xf32>
    %82 = vector.extract_strided_slice %18 {offsets = [0, 24], sizes = [16, 8], strides = [1, 1]} : vector<16x32xf32> to vector<16x8xf32>
    %83 = tpu.transpose %81, [1, 0] : vector<16x8xf32> -> vector<8x16xf32>
    %cst_20 = arith.constant dense<0.000000e+00> : vector<16x16xf32>
    %84 = tpu.matmul %80, %83, %cst_20 {dimension_numbers = #tpu.dot_dimension_numbers<[1], [0], [0], [1], [0, 0, 1, 1], [], []>} : vector<16x8xf32>, vector<8x16xf32>, vector<16x16xf32> -> vector<16x16xf32>
    %85 = arith.addf %84, %28 : vector<16x16xf32>
    %cst_21 = arith.constant dense<0xFF800000> : vector<16xf32>
    %86 = vector.multi_reduction <maximumf>, %85, %cst_21 [1] : vector<16x16xf32> to vector<16xf32>
    %87 = vector.shape_cast %86 : vector<16xf32> to vector<16x1xf32>
    %88 = vector.broadcast %87 : vector<16x1xf32> to vector<16x16xf32>
    %89 = arith.subf %85, %88 : vector<16x16xf32>
    %90 = math.exp %89 : vector<16x16xf32>
    %cst_22 = arith.constant dense<0.000000e+00> : vector<16xf32>
    %91 = vector.multi_reduction <add>, %90, %cst_22 [1] : vector<16x16xf32> to vector<16xf32>
    %92 = vector.shape_cast %91 : vector<16xf32> to vector<16x1xf32>
    %93 = tpu.reciprocal %92 {approx = true} : vector<16x1xf32> -> vector<16x1xf32>
    %94 = vector.broadcast %93 : vector<16x1xf32> to vector<16x16xf32>
    %95 = arith.mulf %90, %94 : vector<16x16xf32>
    %cst_23 = arith.constant dense<0.000000e+00> : vector<16x8xf32>
    %96 = tpu.matmul %95, %82, %cst_23 {dimension_numbers = #tpu.dot_dimension_numbers<[1], [0], [0], [1], [0, 0, 1, 1], [], []>} : vector<16x16xf32>, vector<16x8xf32>, vector<16x8xf32> -> vector<16x8xf32>
    %97 = tpu.concatenate %45, %62, %79, %96 in 1 : vector<16x8xf32>, vector<16x8xf32>, vector<16x8xf32>, vector<16x8xf32> -> vector<16x32xf32>
    %98 = vector.extract_strided_slice %10 {offsets = [0, 96], sizes = [32, 32], strides = [1, 1]} : vector<32x128xf32> to vector<32x32xf32>
    %cst_24 = arith.constant dense<0.000000e+00> : vector<16x32xf32>
    %99 = tpu.matmul %97, %98, %cst_24 {dimension_numbers = #tpu.dot_dimension_numbers<[1], [0], [0], [1], [0, 0, 1, 1], [], []>} : vector<16x32xf32>, vector<32x32xf32>, vector<16x32xf32> -> vector<16x32xf32>
    %100 = vector.broadcast %3 : vector<1x32xf32> to vector<16x32xf32>
    %101 = arith.addf %99, %100 : vector<16x32xf32>
    %102 = arith.addf %0, %101 : vector<16x32xf32>
    %cst_25 = arith.constant dense<0.000000e+00> : vector<16xf32>
    %103 = vector.multi_reduction <add>, %102, %cst_25 [1] : vector<16x32xf32> to vector<16xf32>
    %104 = vector.shape_cast %103 : vector<16xf32> to vector<16x1xf32>
    %cst_26 = arith.constant 3.200000e+01 : f32
    %105 = vector.broadcast %cst_26 : f32 to vector<16x1xf32>
    %106 = arith.divf %104, %105 : vector<16x1xf32>
    %107 = vector.broadcast %106 : vector<16x1xf32> to vector<16x32xf32>
    %108 = arith.subf %102, %107 : vector<16x32xf32>
    %109 = arith.mulf %108, %108 : vector<16x32xf32>
    %cst_27 = arith.constant dense<0.000000e+00> : vector<16xf32>
    %110 = vector.multi_reduction <add>, %109, %cst_27 [1] : vector<16x32xf32> to vector<16xf32>
    %111 = vector.shape_cast %110 : vector<16xf32> to vector<16x1xf32>
    %cst_28 = arith.constant 3.200000e+01 : f32
    %112 = vector.broadcast %cst_28 : f32 to vector<16x1xf32>
    %113 = arith.divf %111, %112 : vector<16x1xf32>
    %114 = vector.broadcast %106 : vector<16x1xf32> to vector<16x32xf32>
    %115 = arith.subf %102, %114 : vector<16x32xf32>
    %cst_29 = arith.constant 9.99999974E-6 : f32
    %116 = vector.broadcast %cst_29 : f32 to vector<16x1xf32>
    %117 = arith.addf %113, %116 : vector<16x1xf32>
    %118 = math.rsqrt %117 : vector<16x1xf32>
    %119 = vector.broadcast %118 : vector<16x1xf32> to vector<16x32xf32>
    %120 = arith.mulf %115, %119 : vector<16x32xf32>
    %121 = vector.broadcast %6 : vector<1x32xf32> to vector<16x32xf32>
    %122 = arith.mulf %120, %121 : vector<16x32xf32>
    %123 = vector.broadcast %7 : vector<1x32xf32> to vector<16x32xf32>
    %124 = arith.addf %122, %123 : vector<16x32xf32>
    %c0_30 = arith.constant 0 : index
    %c0_31 = arith.constant 0 : index
    %125 = vector.load %arg3[%c0_30, %c0_31] : memref<32x64xf32, #tpu.memory_space<vmem>>, vector<32x64xf32>
    %cst_32 = arith.constant dense<0.000000e+00> : vector<16x64xf32>
    %126 = tpu.matmul %124, %125, %cst_32 {dimension_numbers = #tpu.dot_dimension_numbers<[1], [0], [0], [1], [0, 0, 1, 1], [], []>} : vector<16x32xf32>, vector<32x64xf32>, vector<16x64xf32> -> vector<16x64xf32>
    %127 = vector.broadcast %4 : vector<1x64xf32> to vector<16x64xf32>
    %128 = arith.addf %126, %127 : vector<16x64xf32>
    %cst_33 = arith.constant 0.000000e+00 : f32
    %129 = vector.broadcast %cst_33 : f32 to vector<16x64xf32>
    %130 = arith.maximumf %128, %129 : vector<16x64xf32>
    %c0_34 = arith.constant 0 : index
    %c0_35 = arith.constant 0 : index
    %131 = vector.load %arg4[%c0_34, %c0_35] : memref<64x32xf32, #tpu.memory_space<vmem>>, vector<64x32xf32>
    %cst_36 = arith.constant dense<0.000000e+00> : vector<16x32xf32>
    %132 = tpu.matmul %130, %131, %cst_36 {dimension_numbers = #tpu.dot_dimension_numbers<[1], [0], [0], [1], [0, 0, 1, 1], [], []>} : vector<16x64xf32>, vector<64x32xf32>, vector<16x32xf32> -> vector<16x32xf32>
    %133 = vector.broadcast %5 : vector<1x32xf32> to vector<16x32xf32>
    %134 = arith.addf %132, %133 : vector<16x32xf32>
    %135 = arith.addf %124, %134 : vector<16x32xf32>
    %cst_37 = arith.constant dense<0.000000e+00> : vector<16xf32>
    %136 = vector.multi_reduction <add>, %135, %cst_37 [1] : vector<16x32xf32> to vector<16xf32>
    %137 = vector.shape_cast %136 : vector<16xf32> to vector<16x1xf32>
    %cst_38 = arith.constant 3.200000e+01 : f32
    %138 = vector.broadcast %cst_38 : f32 to vector<16x1xf32>
    %139 = arith.divf %137, %138 : vector<16x1xf32>
    %140 = vector.broadcast %139 : vector<16x1xf32> to vector<16x32xf32>
    %141 = arith.subf %135, %140 : vector<16x32xf32>
    %142 = arith.mulf %141, %141 : vector<16x32xf32>
    %cst_39 = arith.constant dense<0.000000e+00> : vector<16xf32>
    %143 = vector.multi_reduction <add>, %142, %cst_39 [1] : vector<16x32xf32> to vector<16xf32>
    %144 = vector.shape_cast %143 : vector<16xf32> to vector<16x1xf32>
    %cst_40 = arith.constant 3.200000e+01 : f32
    %145 = vector.broadcast %cst_40 : f32 to vector<16x1xf32>
    %146 = arith.divf %144, %145 : vector<16x1xf32>
    %147 = vector.broadcast %139 : vector<16x1xf32> to vector<16x32xf32>
    %148 = arith.subf %135, %147 : vector<16x32xf32>
    %cst_41 = arith.constant 9.99999974E-6 : f32
    %149 = vector.broadcast %cst_41 : f32 to vector<16x1xf32>
    %150 = arith.addf %146, %149 : vector<16x1xf32>
    %151 = math.rsqrt %150 : vector<16x1xf32>
    %152 = vector.broadcast %151 : vector<16x1xf32> to vector<16x32xf32>
    %153 = arith.mulf %148, %152 : vector<16x32xf32>
    %154 = vector.broadcast %8 : vector<1x32xf32> to vector<16x32xf32>
    %155 = arith.mulf %153, %154 : vector<16x32xf32>
    %156 = vector.broadcast %9 : vector<1x32xf32> to vector<16x32xf32>
    %157 = arith.addf %155, %156 : vector<16x32xf32>
    %c0_42 = arith.constant 0 : index
    %c0_43 = arith.constant 0 : index
    %158 = vector.load %arg1[%c0_42, %c0_43] : memref<16x32xf32, #tpu.memory_space<vmem>>, vector<16x32xf32>
    %159 = arith.mulf %157, %158 : vector<16x32xf32>
    %c0_44 = arith.constant 0 : index
    %c0_45 = arith.constant 0 : index
    %160 = vector.load %arg6[%c0_44, %c0_45] : memref<16x32xf32, #tpu.memory_space<vmem>>, vector<16x32xf32>
    tpu.vector_store %arg6[%c0_44, %c0_45], %159 {strides = array<i32>} : memref<16x32xf32, #tpu.memory_space<vmem>>, vector<16x32xf32>,
    return
  }
}

</mosaic_0001>

<llo_original>
// kernel: masked_tenc_layer.1
$region0: #{masked_tenc_layer.1}
  #allocation0 [shape = 'u32[]', space=smem, size = 0x4, offset = 0x4, fixed_abs, tag = 'smem constant byte address 0x4 - core index']
  #allocation1 [shape = 'u32[144,128]{1,0:T(1,128)}', space=vmem, size = 0x12000, scoped, tag = 'internal scratch']
  %s0 = inlined_call_operand.vmem [shape: f32[16,32], index: 0, kind: input, shape index: {}]
  %s1 = inlined_call_operand.vmem [shape: f32[16,32], index: 1, kind: input, shape index: {}]
  %s2 = inlined_call_operand.vmem [shape: f32[32,128], index: 2, kind: input, shape index: {}]
  %s3 = inlined_call_operand.vmem [shape: f32[32,64], index: 3, kind: input, shape index: {}]
  %s4 = inlined_call_operand.vmem [shape: f32[64,32], index: 4, kind: input, shape index: {}]
  %s5 = inlined_call_operand.vmem [shape: f32[3,128], index: 5, kind: input, shape index: {}]
  %s6 = inlined_call_operand.hbm [shape: f32[16,32], index: 6, kind: output, shape index: {}]
  %s7 = sld [smem:[#allocation0]]
  $region34: #{masked_tenc_layer.1} parent=0
    _
  %s9 = ssub.s32 1, %s7
  %s10 = scalar_select 0, %s9, %s7
  $region1: #{masked_tenc_layer.1} parent=0
    #allocation2 [shape = 'u8[8192]{0}', space=vmem, size = 0x2000, scoped, tag = 'output window, operand 0, single buffered']
    #allocation3 [shape = 's32[1]{0}', space=sflag, size = 0x4, scoped, tag = 'scoped memory for masked_tenc_layer.1']
    %11 = vsyncpa [#allocation3], 0
    // Predicated region
    $region2: #{masked_tenc_layer.1} parent=1 // pred_check
      _
    $region3: #{masked_tenc_layer.1} parent=1 // pred_check_branch
      %13 = sbr.rel (0) target = $region5
    $region4: #{masked_tenc_layer.1} parent=1 // pred_region
      _
    $region5: #{masked_tenc_layer.1} parent=1 // pred_fallthru
      _
    // Predicated region
    $region6: #{masked_tenc_layer.1} parent=1 // pred_check
      _
    $region7: #{masked_tenc_layer.1} parent=1 // pred_check_branch
      %15 = sbr.rel (0) target = $region9
    $region8: #{masked_tenc_layer.1} parent=1 // pred_region
      _
    $region9: #{masked_tenc_layer.1} parent=1 // pred_fallthru
      _
    // Predicated region
    $region10: #{masked_tenc_layer.1} parent=1 // pred_check
      _
    $region11: #{masked_tenc_layer.1} parent=1 // pred_check_branch
      %17 = sbr.rel (0) target = $region13
    $region12: #{masked_tenc_layer.1} parent=1 // pred_region
      _
    $region13: #{masked_tenc_layer.1} parent=1 // pred_fallthru
      _
    // Predicated region
    $region14: #{masked_tenc_layer.1} parent=1 // pred_check
      _
    $region15: #{masked_tenc_layer.1} parent=1 // pred_check_branch
      %19 = sbr.rel (0) target = $region17
    $region16: #{masked_tenc_layer.1} parent=1 // pred_region
      _
    $region17: #{masked_tenc_layer.1} parent=1 // pred_fallthru
      _
    // Predicated region
    $region18: #{masked_tenc_layer.1} parent=1 // pred_check
      _
    $region19: #{masked_tenc_layer.1} parent=1 // pred_check_branch
      %21 = sbr.rel (0) target = $region21
    $region20: #{masked_tenc_layer.1} parent=1 // pred_region
      _
    $region21: #{masked_tenc_layer.1} parent=1 // pred_fallthru
      _
    // Predicated region
    $region22: #{masked_tenc_layer.1} parent=1 // pred_check
      _
    $region23: #{masked_tenc_layer.1} parent=1 // pred_check_branch
      %23 = sbr.rel (0) target = $region25
    $region24: #{masked_tenc_layer.1} parent=1 // pred_region
      _
    $region25: #{masked_tenc_layer.1} parent=1 // pred_fallthru
      _
    %v24 = vld [vmem:[%s0] sm:$0xff]
    %v25 = vld [vmem:[%s0 + $0x8] sm:$0xff]
    %v26 = vld [vmem:[%s5] sm:$0x7]
    %v27 = vld [vmem:[%s2] sm:$0xff]
    %v28 = vld [vmem:[%s2 + $0x8] sm:$0xff]
    %v29 = vld [vmem:[%s2 + $0x10] sm:$0xff]
    %v30 = vld [vmem:[%s2 + $0x18] sm:$0xff]
    %v31 = vlaneseq
    %v32 = vshrl.u32 %v31, 7
    %v33 = vsub.s32 0, %v32
    %v34 = vrot.slane %v26, %v33
    %vm35 = vcmask 261120
    %v37 = vsel %vm35, %v24, 0
    %v40 = vsel %vm35, %v25, 0
    %42 = vmatprep.subr.mxu0 0.0
    %43 = vmatpush1.msra.mxu0 %v27
    %44 = vmatprep.subr.mxu0 0.0
    %45 = vmatpush1.msra.mxu0 %v28
    %46 = vmatprep.subr.mxu0 0.0
    %47 = vmatpush1.msra.mxu0 %v29
    %48 = vmatprep.subr.mxu0 0.0
    %49 = vmatpush1.msra.mxu0 %v30
    %50 = vmatprep.subr.mxu0 0.0
    %51 = vmatpush1.msra.mxu0 0.0
    %52 = vmatprep.subr.mxu0 0.0
    %53 = vmatpush1.msra.mxu0 0.0
    %54 = vmatprep.subr.mxu0 0.0
    %55 = vmatpush1.msra.mxu0 0.0
    %56 = vmatprep.subr.mxu0 0.0
    %57 = vmatpush1.msra.mxu0 0.0
    %58 = vmatprep.subr.mxu0 0.0
    %59 = vmatpush1.msra.mxu0 0.0
    %60 = vmatprep.subr.mxu0 0.0
    %61 = vmatpush1.msra.mxu0 0.0
    %62 = vmatprep.subr.mxu0 0.0
    %63 = vmatpush1.msra.mxu0 0.0
    %64 = vmatprep.subr.mxu0 0.0
    %65 = vmatpush1.msra.mxu0 0.0
    %66 = vmatprep.subr.mxu0 0.0
    %67 = vmatpush1.msra.mxu0 0.0
    %68 = vmatprep.subr.mxu0 0.0
    %69 = vmatpush1.msra.mxu0 0.0
    %70 = vmatprep.subr.mxu0 0.0
    %71 = vmatpush1.msra.mxu0 0.0
    %72 = vmatprep.subr.mxu0 0.0
    %73 = vmatpush1.msra.mxu0 0.0
    %74 = vmatprep.subr.mxu0 0.0
    %75 = vmatpush1.msra.mxu0 0.0
    %76 = vmatprep.subr.mxu0 0.0
    %77 = vmatpush1.msra.mxu0 0.0
    %78 = vmatprep.subr.mxu0 0.0
    %79 = vmatpush1.msra.mxu0 0.0
    %80 = vmatprep.subr.mxu0 0.0
    %81 = vmatpush1.msra.mxu0 0.0
    %82 = vmatprep.subr.mxu0 0.0
    %83 = vmatpush1.msra.mxu0 0.0
    %84 = vmatprep.subr.mxu0 0.0
    %85 = vmatpush1.msra.mxu0 0.0
    %86 = vmatprep.subr.mxu0 0.0
    %87 = vmatpush1.msra.mxu0 0.0
    %88 = vmatprep.subr.mxu0 0.0
    %89 = vmatpush1.msra.mxu0 0.0
    %90 = vmatprep.subr.mxu0 0.0
    %91 = vmatpush1.msra.mxu0 0.0
    %92 = vmatprep.subr.mxu0 0.0
    %93 = vmatpush1.msra.mxu0 0.0
    %94 = vmatprep.subr.mxu0 0.0
    %95 = vmatpush1.msra.mxu0 0.0
    %96 = vmatprep.subr.mxu0 0.0
    %97 = vmatpush1.msra.mxu0 0.0
    %98 = vmatprep.subr.mxu0 0.0
    %99 = vmatpush1.msra.mxu0 0.0
    %100 = vmatprep.subr.mxu0 0.0
    %101 = vmatpush1.msra.mxu0 0.0
    %102 = vmatprep.subr.mxu0 0.0
    %103 = vmatpush1.msra.mxu0 0.0
    %104 = vmatprep.subr.mxu0 0.0
    %105 = vmatpush1.msra.mxu0 0.0
    %106 = vmatprep.mubr.f32.mxu0 0.0
    %107 = vmatmul.mubr.f32.gmra.mrb[0].mxu0 %v37
    %v108 = vpop.f32.mrb[0].mxu0
    %v109 = vadd.f32 %v34, %v108
    %v110 = vpop.f32.mrb[0].mxu0
    %111 = vmatprep.mubr.f32.mxu0 0.0
    %112 = vmatmul.mubr.f32.gmra.mrb[0].mxu0 %v40
    %v113 = vpop.f32.mrb[0].mxu0
    %v114 = vadd.f32 %v34, %v113
    %v115 = vpop.f32.mrb[0].mxu0
    %116 = vdwg.mxu0
    %v117 = vmul.f32 %v109, 0.35355338
    %v118 = vmul.f32 %v114, 0.35355338
    %v119 = vlaneseq
    %v120 = vshrl.u32 %v119, 7
    %v121 = vadd.s32 %v120, 8
    %v122 = vlaneseq
    %v123 = vand.u32 %v122, 127
    %v124 = vxor.u32 %v120, %v123
    %v125 = vxor.u32 %v121, %v123
    %v126 = vand.u32 %v124, 1
    %v127 = vand.u32 %v125, 1
    %vm128 = vcmp.eq.s32.totalorder %v126, 0
    %vm129 = vcmp.eq.s32.totalorder %v127, 0
    %v130 = vsel %vm128, 0.0, -1e+30
    %v131 = vsel %vm129, 0.0, -1e+30
    %134 = vrot.lane.b32.xlu0 %v109, 96
    %v135 = vpop.permute.xlu0 %134
    %136 = vrot.lane.b32.xlu0 %v114, 96
    %v137 = vpop.permute.xlu0 %136
    %vm138 = vcmask 64512
    %v140 = vsel %vm138, %v117, 0
    %v143 = vsel %vm138, %v118, 0
    %v145 = vsel %vm138, %v135, 0
    %v147 = vsel %vm138, %v137, 0
    %149 = vmatprep.subr.mxu0 0.0
    %150 = vmatpush1.xpose.msra.mxu0 %v145
    %151 = vmatprep.subr.mxu0 0.0
    %152 = vmatpush1.xpose.msra.mxu0 %v147
    %153 = vmatprep.subr.mxu0 0.0
    %154 = vmatpush1.xpose.msra.mxu0 0.0
    %155 = vmatprep.subr.mxu0 0.0
    %156 = vmatpush1.xpose.msra.mxu0 0.0
    %157 = vmatprep.subr.mxu0 0.0
    %158 = vmatpush1.xpose.msra.mxu0 0.0
    %159 = vmatprep.subr.mxu0 0.0
    %160 = vmatpush1.xpose.msra.mxu0 0.0
    %161 = vmatprep.subr.mxu0 0.0
    %162 = vmatpush1.xpose.msra.mxu0 0.0
    %163 = vmatprep.subr.mxu0 0.0
    %164 = vmatpush1.xpose.msra.mxu0 0.0
    %165 = vmatprep.subr.mxu0 0.0
    %166 = vmatpush1.xpose.msra.mxu0 0.0
    %167 = vmatprep.subr.mxu0 0.0
    %168 = vmatpush1.xpose.msra.mxu0 0.0
    %169 = vmatprep.subr.mxu0 0.0
    %170 = vmatpush1.xpose.msra.mxu0 0.0
    %171 = vmatprep.subr.mxu0 0.0
    %172 = vmatpush1.xpose.msra.mxu0 0.0
    %173 = vmatprep.subr.mxu0 0.0
    %174 = vmatpush1.xpose.msra.mxu0 0.0
    %175 = vmatprep.subr.mxu0 0.0
    %176 = vmatpush1.xpose.msra.mxu0 0.0
    %177 = vmatprep.subr.mxu0 0.0
    %178 = vmatpush1.xpose.msra.mxu0 0.0
    %179 = vmatprep.subr.mxu0 0.0
    %180 = vmatpush1.xpose.msra.mxu0 0.0
    %181 = vmatprep.subr.mxu0 0.0
    %182 = vmatpush1.xpose.msra.mxu0 0.0
    %183 = vmatprep.subr.mxu0 0.0
    %184 = vmatpush1.xpose.msra.mxu0 0.0
    %185 = vmatprep.subr.mxu0 0.0
    %186 = vmatpush1.xpose.msra.mxu0 0.0
    %187 = vmatprep.subr.mxu0 0.0
    %188 = vmatpush1.xpose.msra.mxu0 0.0
    %189 = vmatprep.subr.mxu0 0.0
    %190 = vmatpush1.xpose.msra.mxu0 0.0
    %191 = vmatprep.subr.mxu0 0.0
    %192 = vmatpush1.xpose.msra.mxu0 0.0
    %193 = vmatprep.subr.mxu0 0.0
    %194 = vmatpush1.xpose.msra.mxu0 0.0
    %195 = vmatprep.subr.mxu0 0.0
    %196 = vmatpush1.xpose.msra.mxu0 0.0
    %197 = vmatprep.subr.mxu0 0.0
    %198 = vmatpush1.xpose.msra.mxu0 0.0
    %199 = vmatprep.subr.mxu0 0.0
    %200 = vmatpush1.xpose.msra.mxu0 0.0
    %201 = vmatprep.subr.mxu0 0.0
    %202 = vmatpush1.xpose.msra.mxu0 0.0
    %203 = vmatprep.subr.mxu0 0.0
    %204 = vmatpush1.xpose.msra.mxu0 0.0
    %205 = vmatprep.subr.mxu0 0.0
    %206 = vmatpush1.xpose.msra.mxu0 0.0
    %207 = vmatprep.subr.mxu0 0.0
    %208 = vmatpush1.xpose.msra.mxu0 0.0
    %209 = vmatprep.subr.mxu0 0.0
    %210 = vmatpush1.xpose.msra.mxu0 0.0
    %211 = vmatprep.subr.mxu0 0.0
    %212 = vmatpush1.xpose.msra.mxu0 0.0
    %213 = vmatprep.mubr.f32.mxu0 0.0
    %214 = vmatmul.mubr.f32.gmra.mrb[0].mxu0 %v140
    %v215 = vpop.f32.mrb[0].mxu0
    %v216 = vadd.f32 %v130, %v215
    %v217 = vpop.f32.mrb[0].mxu0
    %218 = vmatprep.mubr.f32.mxu0 0.0
    %219 = vmatmul.mubr.f32.gmra.mrb[0].mxu0 %v143
    %v220 = vpop.f32.mrb[0].mxu0
    %v221 = vadd.f32 %v131, %v220
    %v222 = vpop.f32.mrb[0].mxu0
    %223 = vdwg.mxu0
    %vm224 = vcmask 130048
    %v225 = vsel %vm224, %v216, -inf
    %226 = vmax.xlane.f32.xlu0 %v225
    %v227 = vpop.xlane.xlu0 %226
    %v228 = vsel %vm224, %v221, -inf
    %229 = vmax.xlane.f32.xlu0 %v228
    %v230 = vpop.xlane.xlu0 %229
    %v231 = vsub.f32 %v216, %v227
    %v232 = vsub.f32 %v221, %v230
    %v233 = vmul.f32 %v231, 1.442695
    %v234 = vpow.pop %v233
    %v235 = vmul.f32 %v232, 1.442695
    %v236 = vpow.pop %v235
    %v237 = vsel %vm224, %v234, 0.0
    %238 = vadd.xlane.f32.xlu0 %v237
    %v239 = vpop.xlane.xlu0 %238
    %v240 = vsel %vm224, %v236, 0.0
    %241 = vadd.xlane.f32.xlu0 %v240
    %v242 = vpop.xlane.xlu0 %241
    %v243 = vrcp.pop %v239
    %v244 = vrcp.pop %v242
    %v245 = vmul.f32 %v234, %v243
    %v246 = vmul.f32 %v236, %v244
    %247 = vrot.lane.b32.xlu0 %v109, 64
    %v248 = vpop.permute.xlu0 %247
    %249 = vrot.lane.b32.xlu0 %v114, 64
    %v250 = vpop.permute.xlu0 %249
    %v254 = vsel %vm224, %v245, 0
    %v257 = vsel %vm224, %v246, 0
    %259 = vmatprep.subr.mxu0 0.0
    %260 = vmatpush1.msra.mxu0 %v248
    %261 = vmatprep.subr.mxu0 0.0
    %262 = vmatpush1.msra.mxu0 %v250
    %263 = vmatprep.subr.mxu0 0.0
    %264 = vmatpush1.msra.mxu0 0.0
    %265 = vmatprep.subr.mxu0 0.0
    %266 = vmatpush1.msra.mxu0 0.0
    %267 = vmatprep.subr.mxu0 0.0
    %268 = vmatpush1.msra.mxu0 0.0
    %269 = vmatprep.subr.mxu0 0.0
    %270 = vmatpush1.msra.mxu0 0.0
    %271 = vmatprep.subr.mxu0 0.0
    %272 = vmatpush1.msra.mxu0 0.0
    %273 = vmatprep.subr.mxu0 0.0
    %274 = vmatpush1.msra.mxu0 0.0
    %275 = vmatprep.subr.mxu0 0.0
    %276 = vmatpush1.msra.mxu0 0.0
    %277 = vmatprep.subr.mxu0 0.0
    %278 = vmatpush1.msra.mxu0 0.0
    %279 = vmatprep.subr.mxu0 0.0
    %280 = vmatpush1.msra.mxu0 0.0
    %281 = vmatprep.subr.mxu0 0.0
    %282 = vmatpush1.msra.mxu0 0.0
    %283 = vmatprep.subr.mxu0 0.0
    %284 = vmatpush1.msra.mxu0 0.0
    %285 = vmatprep.subr.mxu0 0.0
    %286 = vmatpush1.msra.mxu0 0.0
    %287 = vmatprep.subr.mxu0 0.0
    %288 = vmatpush1.msra.mxu0 0.0
    %289 = vmatprep.subr.mxu0 0.0
    %290 = vmatpush1.msra.mxu0 0.0
    %291 = vmatprep.subr.mxu0 0.0
    %292 = vmatpush1.msra.mxu0 0.0
    %293 = vmatprep.subr.mxu0 0.0
    %294 = vmatpush1.msra.mxu0 0.0
    %295 = vmatprep.subr.mxu0 0.0
    %296 = vmatpush1.msra.mxu0 0.0
    %297 = vmatprep.subr.mxu0 0.0
    %298 = vmatpush1.msra.mxu0 0.0
    %299 = vmatprep.subr.mxu0 0.0
    %300 = vmatpush1.msra.mxu0 0.0
    %301 = vmatprep.subr.mxu0 0.0
    %302 = vmatpush1.msra.mxu0 0.0
    %303 = vmatprep.subr.mxu0 0.0
    %304 = vmatpush1.msra.mxu0 0.0
    %305 = vmatprep.subr.mxu0 0.0
    %306 = vmatpush1.msra.mxu0 0.0
    %307 = vmatprep.subr.mxu0 0.0
    %308 = vmatpush1.msra.mxu0 0.0
    %309 = vmatprep.subr.mxu0 0.0
    %310 = vmatpush1.msra.mxu0 0.0
    %311 = vmatprep.subr.mxu0 0.0
    %312 = vmatpush1.msra.mxu0 0.0
    %313 = vmatprep.subr.mxu0 0.0
    %314 = vmatpush1.msra.mxu0 0.0
    %315 = vmatprep.subr.mxu0 0.0
    %316 = vmatpush1.msra.mxu0 0.0
    %317 = vmatprep.subr.mxu0 0.0
    %318 = vmatpush1.msra.mxu0 0.0
    %319 = vmatprep.subr.mxu0 0.0
    %320 = vmatpush1.msra.mxu0 0.0
    %321 = vmatprep.subr.mxu0 0.0
    %322 = vmatpush1.msra.mxu0 0.0
    %323 = vmatprep.mubr.f32.mxu0 0.0
    %324 = vmatmul.mubr.f32.gmra.mrb[0].mxu0 %v254
    %v325 = vpop.f32.mrb[0].mxu0
    %v326 = vadd.f32 0.0, %v325
    %v327 = vpop.f32.mrb[0].mxu0
    %328 = vmatprep.mubr.f32.mxu0 0.0
    %329 = vmatmul.mubr.f32.gmra.mrb[0].mxu0 %v257
    %v330 = vpop.f32.mrb[0].mxu0
    %v331 = vadd.f32 0.0, %v330
    %v332 = vpop.f32.mrb[0].mxu0
    %333 = vdwg.mxu0
    %334 = vrot.lane.b32.xlu0 %v117, 120
    %v335 = vpop.permute.xlu0 %334
    %336 = vrot.lane.b32.xlu0 %v118, 120
    %v337 = vpop.permute.xlu0 %336
    %338 = vrot.lane.b32.xlu0 %v109, 88
    %v339 = vpop.permute.xlu0 %338
    %340 = vrot.lane.b32.xlu0 %v114, 88
    %v341 = vpop.permute.xlu0 %340
    %v342 = vsel %vm138, %v335, 0
    %v344 = vsel %vm138, %v337, 0
    %v346 = vsel %vm138, %v339, 0
    %v348 = vsel %vm138, %v341, 0
    %350 = vmatprep.subr.mxu0 0.0
    %351 = vmatpush1.xpose.msra.mxu0 %v346
    %352 = vmatprep.subr.mxu0 0.0
    %353 = vmatpush1.xpose.msra.mxu0 %v348
    %354 = vmatprep.subr.mxu0 0.0
    %355 = vmatpush1.xpose.msra.mxu0 0.0
    %356 = vmatprep.subr.mxu0 0.0
    %357 = vmatpush1.xpose.msra.mxu0 0.0
    %358 = vmatprep.subr.mxu0 0.0
    %359 = vmatpush1.xpose.msra.mxu0 0.0
    %360 = vmatprep.subr.mxu0 0.0
    %361 = vmatpush1.xpose.msra.mxu0 0.0
    %362 = vmatprep.subr.mxu0 0.0
    %363 = vmatpush1.xpose.msra.mxu0 0.0
    %364 = vmatprep.subr.mxu0 0.0
    %365 = vmatpush1.xpose.msra.mxu0 0.0
    %366 = vmatprep.subr.mxu0 0.0
    %367 = vmatpush1.xpose.msra.mxu0 0.0
    %368 = vmatprep.subr.mxu0 0.0
    %369 = vmatpush1.xpose.msra.mxu0 0.0
    %370 = vmatprep.subr.mxu0 0.0
    %371 = vmatpush1.xpose.msra.mxu0 0.0
    %372 = vmatprep.subr.mxu0 0.0
    %373 = vmatpush1.xpose.msra.mxu0 0.0
    %374 = vmatprep.subr.mxu0 0.0
    %375 = vmatpush1.xpose.msra.mxu0 0.0
    %376 = vmatprep.subr.mxu0 0.0
    %377 = vmatpush1.xpose.msra.mxu0 0.0
    %378 = vmatprep.subr.mxu0 0.0
    %379 = vmatpush1.xpose.msra.mxu0 0.0
    %380 = vmatprep.subr.mxu0 0.0
    %381 = vmatpush1.xpose.msra.mxu0 0.0
    %382 = vmatprep.subr.mxu0 0.0
    %383 = vmatpush1.xpose.msra.mxu0 0.0
    %384 = vmatprep.subr.mxu0 0.0
    %385 = vmatpush1.xpose.msra.mxu0 0.0
    %386 = vmatprep.subr.mxu0 0.0
    %387 = vmatpush1.xpose.msra.mxu0 0.0
    %388 = vmatprep.subr.mxu0 0.0
    %389 = vmatpush1.xpose.msra.mxu0 0.0
    %390 = vmatprep.subr.mxu0 0.0
    %391 = vmatpush1.xpose.msra.mxu0 0.0
    %392 = vmatprep.subr.mxu0 0.0
    %393 = vmatpush1.xpose.msra.mxu0 0.0
    %394 = vmatprep.subr.mxu0 0.0
    %395 = vmatpush1.xpose.msra.mxu0 0.0
    %396 = vmatprep.subr.mxu0 0.0
    %397 = vmatpush1.xpose.msra.mxu0 0.0
    %398 = vmatprep.subr.mxu0 0.0
    %399 = vmatpush1.xpose.msra.mxu0 0.0
    %400 = vmatprep.subr.mxu0 0.0
    %401 = vmatpush1.xpose.msra.mxu0 0.0
    %402 = vmatprep.subr.mxu0 0.0
    %403 = vmatpush1.xpose.msra.mxu0 0.0
    %404 = vmatprep.subr.mxu0 0.0
    %405 = vmatpush1.xpose.msra.mxu0 0.0
    %406 = vmatprep.subr.mxu0 0.0
    %407 = vmatpush1.xpose.msra.mxu0 0.0
    %408 = vmatprep.subr.mxu0 0.0
    %409 = vmatpush1.xpose.msra.mxu0 0.0
    %410 = vmatprep.subr.mxu0 0.0
    %411 = vmatpush1.xpose.msra.mxu0 0.0
    %412 = vmatprep.subr.mxu0 0.0
    %413 = vmatpush1.xpose.msra.mxu0 0.0
    %414 = vmatprep.mubr.f32.mxu0 0.0
    %415 = vmatmul.mubr.f32.gmra.mrb[0].mxu0 %v342
    %v416 = vpop.f32.mrb[0].mxu0
    %v417 = vadd.f32 %v130, %v416
    %v418 = vpop.f32.mrb[0].mxu0
    %419 = vmatprep.mubr.f32.mxu0 0.0
    %420 = vmatmul.mubr.f32.gmra.mrb[0].mxu0 %v344
    %v421 = vpop.f32.mrb[0].mxu0
    %v422 = vadd.f32 %v131, %v421
    %v423 = vpop.f32.mrb[0].mxu0
    %424 = vdwg.mxu0
    %v425 = vsel %vm224, %v417, -inf
    %426 = vmax.xlane.f32.xlu0 %v425
    %v427 = vpop.xlane.xlu0 %426
    %v428 = vsel %vm224, %v422, -inf
    %429 = vmax.xlane.f32.xlu0 %v428
    %v430 = vpop.xlane.xlu0 %429
    %v431 = vsub.f32 %v417, %v427
    %v432 = vsub.f32 %v422, %v430
    %v433 = vmul.f32 %v431, 1.442695
    %v434 = vpow.pop %v433
    %v435 = vmul.f32 %v432, 1.442695
    %v436 = vpow.pop %v435
    %v437 = vsel %vm224, %v434, 0.0
    %438 = vadd.xlane.f32.xlu0 %v437
    %v439 = vpop.xlane.xlu0 %438
    %v440 = vsel %vm224, %v436, 0.0
    %441 = vadd.xlane.f32.xlu0 %v440
    %v442 = vpop.xlane.xlu0 %441
    %v443 = vrcp.pop %v439
    %v444 = vrcp.pop %v442
    %v445 = vmul.f32 %v434, %v443
    %v446 = vmul.f32 %v436, %v444
    %447 = vrot.lane.b32.xlu0 %v109, 56
    %v448 = vpop.permute.xlu0 %447
    %449 = vrot.lane.b32.xlu0 %v114, 56
    %v450 = vpop.permute.xlu0 %449
    %v454 = vsel %vm224, %v445, 0
    %v457 = vsel %vm224, %v446, 0
    %459 = vmatprep.subr.mxu0 0.0
    %460 = vmatpush1.msra.mxu0 %v448
    %461 = vmatprep.subr.mxu0 0.0
    %462 = vmatpush1.msra.mxu0 %v450
    %463 = vmatprep.subr.mxu0 0.0
    %464 = vmatpush1.msra.mxu0 0.0
    %465 = vmatprep.subr.mxu0 0.0
    %466 = vmatpush1.msra.mxu0 0.0
    %467 = vmatprep.subr.mxu0 0.0
    %468 = vmatpush1.msra.mxu0 0.0
    %469 = vmatprep.subr.mxu0 0.0
    %470 = vmatpush1.msra.mxu0 0.0
    %471 = vmatprep.subr.mxu0 0.0
    %472 = vmatpush1.msra.mxu0 0.0
    %473 = vmatprep.subr.mxu0 0.0
    %474 = vmatpush1.msra.mxu0 0.0
    %475 = vmatprep.subr.mxu0 0.0
    %476 = vmatpush1.msra.mxu0 0.0
    %477 = vmatprep.subr.mxu0 0.0
    %478 = vmatpush1.msra.mxu0 0.0
    %479 = vmatprep.subr.mxu0 0.0
    %480 = vmatpush1.msra.mxu0 0.0
    %481 = vmatprep.subr.mxu0 0.0
    %482 = vmatpush1.msra.mxu0 0.0
    %483 = vmatprep.subr.mxu0 0.0
    %484 = vmatpush1.msra.mxu0 0.0
    %485 = vmatprep.subr.mxu0 0.0
    %486 = vmatpush1.msra.mxu0 0.0
    %487 = vmatprep.subr.mxu0 0.0
    %488 = vmatpush1.msra.mxu0 0.0
    %489 = vmatprep.subr.mxu0 0.0
    %490 = vmatpush1.msra.mxu0 0.0
    %491 = vmatprep.subr.mxu0 0.0
    %492 = vmatpush1.msra.mxu0 0.0
    %493 = vmatprep.subr.mxu0 0.0
    %494 = vmatpush1.msra.mxu0 0.0
    %495 = vmatprep.subr.mxu0 0.0
    %496 = vmatpush1.msra.mxu0 0.0
    %497 = vmatprep.subr.mxu0 0.0
    %498 = vmatpush1.msra.mxu0 0.0
    %499 = vmatprep.subr.mxu0 0.0
    %500 = vmatpush1.msra.mxu0 0.0
    %501 = vmatprep.subr.mxu0 0.0
    %502 = vmatpush1.msra.mxu0 0.0
    %503 = vmatprep.subr.mxu0 0.0
    %504 = vmatpush1.msra.mxu0 0.0
    %505 = vmatprep.subr.mxu0 0.0
    %506 = vmatpush1.msra.mxu0 0.0
    %507 = vmatprep.subr.mxu0 0.0
    %508 = vmatpush1.msra.mxu0 0.0
    %509 = vmatprep.subr.mxu0 0.0
    %510 = vmatpush1.msra.mxu0 0.0
    %511 = vmatprep.subr.mxu0 0.0
    %512 = vmatpush1.msra.mxu0 0.0
    %513 = vmatprep.subr.mxu0 0.0
    %514 = vmatpush1.msra.mxu0 0.0
    %515 = vmatprep.subr.mxu0 0.0
    %516 = vmatpush1.msra.mxu0 0.0
    %517 = vmatprep.subr.mxu0 0.0
    %518 = vmatpush1.msra.mxu0 0.0
    %519 = vmatprep.subr.mxu0 0.0
    %520 = vmatpush1.msra.mxu0 0.0
    %521 = vmatprep.subr.mxu0 0.0
    %522 = vmatpush1.msra.mxu0 0.0
    %523 = vmatprep.mubr.f32.mxu0 0.0
    %524 = vmatmul.mubr.f32.gmra.mrb[0].mxu0 %v454
    %v525 = vpop.f32.mrb[0].mxu0
    %v526 = vadd.f32 0.0, %v525
    %v527 = vpop.f32.mrb[0].mxu0
    %528 = vmatprep.mubr.f32.mxu0 0.0
    %529 = vmatmul.mubr.f32.gmra.mrb[0].mxu0 %v457
    %v530 = vpop.f32.mrb[0].mxu0
    %v531 = vadd.f32 0.0, %v530
    %v532 = vpop.f32.mrb[0].mxu0
    %533 = vdwg.mxu0
    %534 = vrot.lane.b32.xlu0 %v117, 112
    %v535 = vpop.permute.xlu0 %534
    %536 = vrot.lane.b32.xlu0 %v118, 112
    %v537 = vpop.permute.xlu0 %536
    %538 = vrot.lane.b32.xlu0 %v109, 80
    %v539 = vpop.permute.xlu0 %538
    %540 = vrot.lane.b32.xlu0 %v114, 80
    %v541 = vpop.permute.xlu0 %540
    %v542 = vsel %vm138, %v535, 0
    %v544 = vsel %vm138, %v537, 0
    %v546 = vsel %vm138, %v539, 0
    %v548 = vsel %vm138, %v541, 0
    %550 = vmatprep.subr.mxu0 0.0
    %551 = vmatpush1.xpose.msra.mxu0 %v546
    %552 = vmatprep.subr.mxu0 0.0
    %553 = vmatpush1.xpose.msra.mxu0 %v548
    %554 = vmatprep.subr.mxu0 0.0
    %555 = vmatpush1.xpose.msra.mxu0 0.0
    %556 = vmatprep.subr.mxu0 0.0
    %557 = vmatpush1.xpose.msra.mxu0 0.0
    %558 = vmatprep.subr.mxu0 0.0
    %559 = vmatpush1.xpose.msra.mxu0 0.0
    %560 = vmatprep.subr.mxu0 0.0
    %561 = vmatpush1.xpose.msra.mxu0 0.0
    %562 = vmatprep.subr.mxu0 0.0
    %563 = vmatpush1.xpose.msra.mxu0 0.0
    %564 = vmatprep.subr.mxu0 0.0
    %565 = vmatpush1.xpose.msra.mxu0 0.0
    %566 = vmatprep.subr.mxu0 0.0
    %567 = vmatpush1.xpose.msra.mxu0 0.0
    %568 = vmatprep.subr.mxu0 0.0
    %569 = vmatpush1.xpose.msra.mxu0 0.0
    %570 = vmatprep.subr.mxu0 0.0
    %571 = vmatpush1.xpose.msra.mxu0 0.0
    %572 = vmatprep.subr.mxu0 0.0
    %573 = vmatpush1.xpose.msra.mxu0 0.0
    %574 = vmatprep.subr.mxu0 0.0
    %575 = vmatpush1.xpose.msra.mxu0 0.0
    %576 = vmatprep.subr.mxu0 0.0
    %577 = vmatpush1.xpose.msra.mxu0 0.0
    %578 = vmatprep.subr.mxu0 0.0
    %579 = vmatpush1.xpose.msra.mxu0 0.0
    %580 = vmatprep.subr.mxu0 0.0
    %581 = vmatpush1.xpose.msra.mxu0 0.0
    %582 = vmatprep.subr.mxu0 0.0
    %583 = vmatpush1.xpose.msra.mxu0 0.0
    %584 = vmatprep.subr.mxu0 0.0
    %585 = vmatpush1.xpose.msra.mxu0 0.0
    %586 = vmatprep.subr.mxu0 0.0
    %587 = vmatpush1.xpose.msra.mxu0 0.0
    %588 = vmatprep.subr.mxu0 0.0
    %589 = vmatpush1.xpose.msra.mxu0 0.0
    %590 = vmatprep.subr.mxu0 0.0
    %591 = vmatpush1.xpose.msra.mxu0 0.0
    %592 = vmatprep.subr.mxu0 0.0
    %593 = vmatpush1.xpose.msra.mxu0 0.0
    %594 = vmatprep.subr.mxu0 0.0
    %595 = vmatpush1.xpose.msra.mxu0 0.0
    %596 = vmatprep.subr.mxu0 0.0
    %597 = vmatpush1.xpose.msra.mxu0 0.0
    %598 = vmatprep.subr.mxu0 0.0
    %599 = vmatpush1.xpose.msra.mxu0 0.0
    %600 = vmatprep.subr.mxu0 0.0
    %601 = vmatpush1.xpose.msra.mxu0 0.0
    %602 = vmatprep.subr.mxu0 0.0
    %603 = vmatpush1.xpose.msra.mxu0 0.0
    %604 = vmatprep.subr.mxu0 0.0
    %605 = vmatpush1.xpose.msra.mxu0 0.0
    %606 = vmatprep.subr.mxu0 0.0
    %607 = vmatpush1.xpose.msra.mxu0 0.0
    %608 = vmatprep.subr.mxu0 0.0
    %609 = vmatpush1.xpose.msra.mxu0 0.0
    %610 = vmatprep.subr.mxu0 0.0
    %611 = vmatpush1.xpose.msra.mxu0 0.0
    %612 = vmatprep.subr.mxu0 0.0
    %613 = vmatpush1.xpose.msra.mxu0 0.0
    %614 = vmatprep.mubr.f32.mxu0 0.0
    %615 = vmatmul.mubr.f32.gmra.mrb[0].mxu0 %v542
    %v616 = vpop.f32.mrb[0].mxu0
    %v617 = vadd.f32 %v130, %v616
    %v618 = vpop.f32.mrb[0].mxu0
    %619 = vmatprep.mubr.f32.mxu0 0.0
    %620 = vmatmul.mubr.f32.gmra.mrb[0].mxu0 %v544
    %v621 = vpop.f32.mrb[0].mxu0
    %v622 = vadd.f32 %v131, %v621
    %v623 = vpop.f32.mrb[0].mxu0
    %624 = vdwg.mxu0
    %v625 = vsel %vm224, %v617, -inf
    %626 = vmax.xlane.f32.xlu0 %v625
    %v627 = vpop.xlane.xlu0 %626
    %v628 = vsel %vm224, %v622, -inf
    %629 = vmax.xlane.f32.xlu0 %v628
    %v630 = vpop.xlane.xlu0 %629
    %v631 = vsub.f32 %v617, %v627
    %v632 = vsub.f32 %v622, %v630
    %v633 = vmul.f32 %v631, 1.442695
    %v634 = vpow.pop %v633
    %v635 = vmul.f32 %v632, 1.442695
    %v636 = vpow.pop %v635
    %v637 = vsel %vm224, %v634, 0.0
    %638 = vadd.xlane.f32.xlu0 %v637
    %v639 = vpop.xlane.xlu0 %638
    %v640 = vsel %vm224, %v636, 0.0
    %641 = vadd.xlane.f32.xlu0 %v640
    %v642 = vpop.xlane.xlu0 %641
    %v643 = vrcp.pop %v639
    %v644 = vrcp.pop %v642
    %v645 = vmul.f32 %v634, %v643
    %v646 = vmul.f32 %v636, %v644
    %647 = vrot.lane.b32.xlu0 %v109, 48
    %v648 = vpop.permute.xlu0 %647
    %649 = vrot.lane.b32.xlu0 %v114, 48
    %v650 = vpop.permute.xlu0 %649
    %v654 = vsel %vm224, %v645, 0
    %v657 = vsel %vm224, %v646, 0
    %659 = vmatprep.subr.mxu0 0.0
    %660 = vmatpush1.msra.mxu0 %v648
    %661 = vmatprep.subr.mxu0 0.0
    %662 = vmatpush1.msra.mxu0 %v650
    %663 = vmatprep.subr.mxu0 0.0
    %664 = vmatpush1.msra.mxu0 0.0
    %665 = vmatprep.subr.mxu0 0.0
    %666 = vmatpush1.msra.mxu0 0.0
    %667 = vmatprep.subr.mxu0 0.0
    %668 = vmatpush1.msra.mxu0 0.0
    %669 = vmatprep.subr.mxu0 0.0
    %670 = vmatpush1.msra.mxu0 0.0
    %671 = vmatprep.subr.mxu0 0.0
    %672 = vmatpush1.msra.mxu0 0.0
    %673 = vmatprep.subr.mxu0 0.0
    %674 = vmatpush1.msra.mxu0 0.0
    %675 = vmatprep.subr.mxu0 0.0
    %676 = vmatpush1.msra.mxu0 0.0
    %677 = vmatprep.subr.mxu0 0.0
    %678 = vmatpush1.msra.mxu0 0.0
    %679 = vmatprep.subr.mxu0 0.0
    %680 = vmatpush1.msra.mxu0 0.0
    %681 = vmatprep.subr.mxu0 0.0
    %682 = vmatpush1.msra.mxu0 0.0
    %683 = vmatprep.subr.mxu0 0.0
    %684 = vmatpush1.msra.mxu0 0.0
    %685 = vmatprep.subr.mxu0 0.0
    %686 = vmatpush1.msra.mxu0 0.0
    %687 = vmatprep.subr.mxu0 0.0
    %688 = vmatpush1.msra.mxu0 0.0
    %689 = vmatprep.subr.mxu0 0.0
    %690 = vmatpush1.msra.mxu0 0.0
    %691 = vmatprep.subr.mxu0 0.0
    %692 = vmatpush1.msra.mxu0 0.0
    %693 = vmatprep.subr.mxu0 0.0
    %694 = vmatpush1.msra.mxu0 0.0
    %695 = vmatprep.subr.mxu0 0.0
    %696 = vmatpush1.msra.mxu0 0.0
    %697 = vmatprep.subr.mxu0 0.0
    %698 = vmatpush1.msra.mxu0 0.0
    %699 = vmatprep.subr.mxu0 0.0
    %700 = vmatpush1.msra.mxu0 0.0
    %701 = vmatprep.subr.mxu0 0.0
    %702 = vmatpush1.msra.mxu0 0.0
    %703 = vmatprep.subr.mxu0 0.0
    %704 = vmatpush1.msra.mxu0 0.0
    %705 = vmatprep.subr.mxu0 0.0
    %706 = vmatpush1.msra.mxu0 0.0
    %707 = vmatprep.subr.mxu0 0.0
    %708 = vmatpush1.msra.mxu0 0.0
    %709 = vmatprep.subr.mxu0 0.0
    %710 = vmatpush1.msra.mxu0 0.0
    %711 = vmatprep.subr.mxu0 0.0
    %712 = vmatpush1.msra.mxu0 0.0
    %713 = vmatprep.subr.mxu0 0.0
    %714 = vmatpush1.msra.mxu0 0.0
    %715 = vmatprep.subr.mxu0 0.0
    %716 = vmatpush1.msra.mxu0 0.0
    %717 = vmatprep.subr.mxu0 0.0
    %718 = vmatpush1.msra.mxu0 0.0
    %719 = vmatprep.subr.mxu0 0.0
    %720 = vmatpush1.msra.mxu0 0.0
    %721 = vmatprep.subr.mxu0 0.0
    %722 = vmatpush1.msra.mxu0 0.0
    %723 = vmatprep.mubr.f32.mxu0 0.0
    %724 = vmatmul.mubr.f32.gmra.mrb[0].mxu0 %v654
    %v725 = vpop.f32.mrb[0].mxu0
    %v726 = vadd.f32 0.0, %v725
    %v727 = vpop.f32.mrb[0].mxu0
    %728 = vmatprep.mubr.f32.mxu0 0.0
    %729 = vmatmul.mubr.f32.gmra.mrb[0].mxu0 %v657
    %v730 = vpop.f32.mrb[0].mxu0
    %v731 = vadd.f32 0.0, %v730
    %v732 = vpop.f32.mrb[0].mxu0
    %733 = vdwg.mxu0
    %734 = vrot.lane.b32.xlu0 %v117, 104
    %v735 = vpop.permute.xlu0 %734
    %736 = vrot.lane.b32.xlu0 %v118, 104
    %v737 = vpop.permute.xlu0 %736
    %738 = vrot.lane.b32.xlu0 %v109, 72
    %v739 = vpop.permute.xlu0 %738
    %740 = vrot.lane.b32.xlu0 %v114, 72
    %v741 = vpop.permute.xlu0 %740
    %v742 = vsel %vm138, %v735, 0
    %v744 = vsel %vm138, %v737, 0
    %v746 = vsel %vm138, %v739, 0
    %v748 = vsel %vm138, %v741, 0
    %750 = vmatprep.subr.mxu0 0.0
    %751 = vmatpush1.xpose.msra.mxu0 %v746
    %752 = vmatprep.subr.mxu0 0.0
    %753 = vmatpush1.xpose.msra.mxu0 %v748
    %754 = vmatprep.subr.mxu0 0.0
    %755 = vmatpush1.xpose.msra.mxu0 0.0
    %756 = vmatprep.subr.mxu0 0.0
    %757 = vmatpush1.xpose.msra.mxu0 0.0
    %758 = vmatprep.subr.mxu0 0.0
    %759 = vmatpush1.xpose.msra.mxu0 0.0
    %760 = vmatprep.subr.mxu0 0.0
    %761 = vmatpush1.xpose.msra.mxu0 0.0
    %762 = vmatprep.subr.mxu0 0.0
    %763 = vmatpush1.xpose.msra.mxu0 0.0
    %764 = vmatprep.subr.mxu0 0.0
    %765 = vmatpush1.xpose.msra.mxu0 0.0
    %766 = vmatprep.subr.mxu0 0.0
    %767 = vmatpush1.xpose.msra.mxu0 0.0
    %768 = vmatprep.subr.mxu0 0.0
    %769 = vmatpush1.xpose.msra.mxu0 0.0
    %770 = vmatprep.subr.mxu0 0.0
    %771 = vmatpush1.xpose.msra.mxu0 0.0
    %772 = vmatprep.subr.mxu0 0.0
    %773 = vmatpush1.xpose.msra.mxu0 0.0
    %774 = vmatprep.subr.mxu0 0.0
    %775 = vmatpush1.xpose.msra.mxu0 0.0
    %776 = vmatprep.subr.mxu0 0.0
    %777 = vmatpush1.xpose.msra.mxu0 0.0
    %778 = vmatprep.subr.mxu0 0.0
    %779 = vmatpush1.xpose.msra.mxu0 0.0
    %780 = vmatprep.subr.mxu0 0.0
    %781 = vmatpush1.xpose.msra.mxu0 0.0
    %782 = vmatprep.subr.mxu0 0.0
    %783 = vmatpush1.xpose.msra.mxu0 0.0
    %784 = vmatprep.subr.mxu0 0.0
    %785 = vmatpush1.xpose.msra.mxu0 0.0
    %786 = vmatprep.subr.mxu0 0.0
    %787 = vmatpush1.xpose.msra.mxu0 0.0
    %788 = vmatprep.subr.mxu0 0.0
    %789 = vmatpush1.xpose.msra.mxu0 0.0
    %790 = vmatprep.subr.mxu0 0.0
    %791 = vmatpush1.xpose.msra.mxu0 0.0
    %792 = vmatprep.subr.mxu0 0.0
    %793 = vmatpush1.xpose.msra.mxu0 0.0
    %794 = vmatprep.subr.mxu0 0.0
    %795 = vmatpush1.xpose.msra.mxu0 0.0
    %796 = vmatprep.subr.mxu0 0.0
    %797 = vmatpush1.xpose.msra.mxu0 0.0
    %798 = vmatprep.subr.mxu0 0.0
    %799 = vmatpush1.xpose.msra.mxu0 0.0
    %800 = vmatprep.subr.mxu0 0.0
    %801 = vmatpush1.xpose.msra.mxu0 0.0
    %802 = vmatprep.subr.mxu0 0.0
    %803 = vmatpush1.xpose.msra.mxu0 0.0
    %804 = vmatprep.subr.mxu0 0.0
    %805 = vmatpush1.xpose.msra.mxu0 0.0
    %806 = vmatprep.subr.mxu0 0.0
    %807 = vmatpush1.xpose.msra.mxu0 0.0
    %808 = vmatprep.subr.mxu0 0.0
    %809 = vmatpush1.xpose.msra.mxu0 0.0
    %810 = vmatprep.subr.mxu0 0.0
    %811 = vmatpush1.xpose.msra.mxu0 0.0
    %812 = vmatprep.subr.mxu0 0.0
    %813 = vmatpush1.xpose.msra.mxu0 0.0
    %814 = vmatprep.mubr.f32.mxu0 0.0
    %815 = vmatmul.mubr.f32.gmra.mrb[0].mxu0 %v742
    %v816 = vpop.f32.mrb[0].mxu0
    %v817 = vadd.f32 %v130, %v816
    %v818 = vpop.f32.mrb[0].mxu0
    %819 = vmatprep.mubr.f32.mxu0 0.0
    %820 = vmatmul.mubr.f32.gmra.mrb[0].mxu0 %v744
    %v821 = vpop.f32.mrb[0].mxu0
    %v822 = vadd.f32 %v131, %v821
    %v823 = vpop.f32.mrb[0].mxu0
    %824 = vdwg.mxu0
    %v825 = vsel %vm224, %v817, -inf
    %826 = vmax.xlane.f32.xlu0 %v825
    %v827 = vpop.xlane.xlu0 %826
    %v828 = vsel %vm224, %v822, -inf
    %829 = vmax.xlane.f32.xlu0 %v828
    %v830 = vpop.xlane.xlu0 %829
    %v831 = vsub.f32 %v817, %v827
    %v832 = vsub.f32 %v822, %v830
    %v833 = vmul.f32 %v831, 1.442695
    %v834 = vpow.pop %v833
    %v835 = vmul.f32 %v832, 1.442695
    %v836 = vpow.pop %v835
    %v837 = vsel %vm224, %v834, 0.0
    %838 = vadd.xlane.f32.xlu0 %v837
    %v839 = vpop.xlane.xlu0 %838
    %v840 = vsel %vm224, %v836, 0.0
    %841 = vadd.xlane.f32.xlu0 %v840
    %v842 = vpop.xlane.xlu0 %841
    %v843 = vrcp.pop %v839
    %v844 = vrcp.pop %v842
    %v845 = vmul.f32 %v834, %v843
    %v846 = vmul.f32 %v836, %v844
    %847 = vrot.lane.b32.xlu0 %v109, 40
    %v848 = vpop.permute.xlu0 %847
    %849 = vrot.lane.b32.xlu0 %v114, 40
    %v850 = vpop.permute.xlu0 %849
    %v854 = vsel %vm224, %v845, 0
    %v857 = vsel %vm224, %v846, 0
    %859 = vmatprep.subr.mxu0 0.0
    %860 = vmatpush1.msra.mxu0 %v848
    %861 = vmatprep.subr.mxu0 0.0
    %862 = vmatpush1.msra.mxu0 %v850
    %863 = vmatprep.subr.mxu0 0.0
    %864 = vmatpush1.msra.mxu0 0.0
    %865 = vmatprep.subr.mxu0 0.0
    %866 = vmatpush1.msra.mxu0 0.0
    %867 = vmatprep.subr.mxu0 0.0
    %868 = vmatpush1.msra.mxu0 0.0
    %869 = vmatprep.subr.mxu0 0.0
    %870 = vmatpush1.msra.mxu0 0.0
    %871 = vmatprep.subr.mxu0 0.0
    %872 = vmatpush1.msra.mxu0 0.0
    %873 = vmatprep.subr.mxu0 0.0
    %874 = vmatpush1.msra.mxu0 0.0
    %875 = vmatprep.subr.mxu0 0.0
    %876 = vmatpush1.msra.mxu0 0.0
    %877 = vmatprep.subr.mxu0 0.0
    %878 = vmatpush1.msra.mxu0 0.0
    %879 = vmatprep.subr.mxu0 0.0
    %880 = vmatpush1.msra.mxu0 0.0
    %881 = vmatprep.subr.mxu0 0.0
    %882 = vmatpush1.msra.mxu0 0.0
    %883 = vmatprep.subr.mxu0 0.0
    %884 = vmatpush1.msra.mxu0 0.0
    %885 = vmatprep.subr.mxu0 0.0
    %886 = vmatpush1.msra.mxu0 0.0
    %887 = vmatprep.subr.mxu0 0.0
    %888 = vmatpush1.msra.mxu0 0.0
    %889 = vmatprep.subr.mxu0 0.0
    %890 = vmatpush1.msra.mxu0 0.0
    %891 = vmatprep.subr.mxu0 0.0
    %892 = vmatpush1.msra.mxu0 0.0
    %893 = vmatprep.subr.mxu0 0.0
    %894 = vmatpush1.msra.mxu0 0.0
    %895 = vmatprep.subr.mxu0 0.0
    %896 = vmatpush1.msra.mxu0 0.0
    %897 = vmatprep.subr.mxu0 0.0
    %898 = vmatpush1.msra.mxu0 0.0
    %899 = vmatprep.subr.mxu0 0.0
    %900 = vmatpush1.msra.mxu0 0.0
    %901 = vmatprep.subr.mxu0 0.0
    %902 = vmatpush1.msra.mxu0 0.0
    %903 = vmatprep.subr.mxu0 0.0
    %904 = vmatpush1.msra.mxu0 0.0
    %905 = vmatprep.subr.mxu0 0.0
    %906 = vmatpush1.msra.mxu0 0.0
    %907 = vmatprep.subr.mxu0 0.0
    %908 = vmatpush1.msra.mxu0 0.0
    %909 = vmatprep.subr.mxu0 0.0
    %910 = vmatpush1.msra.mxu0 0.0
    %911 = vmatprep.subr.mxu0 0.0
    %912 = vmatpush1.msra.mxu0 0.0
    %913 = vmatprep.subr.mxu0 0.0
    %914 = vmatpush1.msra.mxu0 0.0
    %915 = vmatprep.subr.mxu0 0.0
    %916 = vmatpush1.msra.mxu0 0.0
    %917 = vmatprep.subr.mxu0 0.0
    %918 = vmatpush1.msra.mxu0 0.0
    %919 = vmatprep.subr.mxu0 0.0
    %920 = vmatpush1.msra.mxu0 0.0
    %921 = vmatprep.subr.mxu0 0.0
    %922 = vmatpush1.msra.mxu0 0.0
    %923 = vmatprep.mubr.f32.mxu0 0.0
    %924 = vmatmul.mubr.f32.gmra.mrb[0].mxu0 %v854
    %v925 = vpop.f32.mrb[0].mxu0
    %v926 = vadd.f32 0.0, %v925
    %v927 = vpop.f32.mrb[0].mxu0
    %928 = vmatprep.mubr.f32.mxu0 0.0
    %929 = vmatmul.mubr.f32.gmra.mrb[0].mxu0 %v857
    %v930 = vpop.f32.mrb[0].mxu0
    %v931 = vadd.f32 0.0, %v930
    %v932 = vpop.f32.mrb[0].mxu0
    %933 = vdwg.mxu0
    %936 = vrot.lane.b32.xlu0 %v526, 8
    %v937 = vpop.permute.xlu0 %936
    %938 = vrot.lane.b32.xlu0 %v531, 8
    %v939 = vpop.permute.xlu0 %938
    %944 = vrot.lane.b32.xlu0 %v726, 16
    %v945 = vpop.permute.xlu0 %944
    %946 = vrot.lane.b32.xlu0 %v731, 16
    %v947 = vpop.permute.xlu0 %946
    %952 = vrot.lane.b32.xlu0 %v926, 24
    %v953 = vpop.permute.xlu0 %952
    %954 = vrot.lane.b32.xlu0 %v931, 24
    %v955 = vpop.permute.xlu0 %954
    %v958 = vsel %vm138, %v326, %v937
    %v959 = vsel %vm138, %v331, %v939
    %v960 = vsel %vm224, %v958, %v945
    %v961 = vsel %vm224, %v959, %v947
    %vm962 = vcmask 195584
    %v963 = vsel %vm962, %v960, %v953
    %v964 = vsel %vm962, %v961, %v955
    %969 = vrot.lane.b32.xlu0 %v27, 32
    %v970 = vpop.permute.xlu0 %969
    %971 = vrot.lane.b32.xlu0 %v28, 32
    %v972 = vpop.permute.xlu0 %971
    %973 = vrot.lane.b32.xlu0 %v29, 32
    %v974 = vpop.permute.xlu0 %973
    %975 = vrot.lane.b32.xlu0 %v30, 32
    %v976 = vpop.permute.xlu0 %975
    %982 = vrot.lane.b32.xlu0 %v34, 32
    %v983 = vpop.permute.xlu0 %982
    %v986 = vsel %vm35, %v963, 0
    %v989 = vsel %vm35, %v964, 0
    %991 = vmatprep.subr.mxu0 0.0
    %992 = vmatpush1.msra.mxu0 %v970
    %993 = vmatprep.subr.mxu0 0.0
    %994 = vmatpush1.msra.mxu0 %v972
    %995 = vmatprep.subr.mxu0 0.0
    %996 = vmatpush1.msra.mxu0 %v974
    %997 = vmatprep.subr.mxu0 0.0
    %998 = vmatpush1.msra.mxu0 %v976
    %999 = vmatprep.subr.mxu0 0.0
    %1000 = vmatpush1.msra.mxu0 0.0
    %1001 = vmatprep.subr.mxu0 0.0
    %1002 = vmatpush1.msra.mxu0 0.0
    %1003 = vmatprep.subr.mxu0 0.0
    %1004 = vmatpush1.msra.mxu0 0.0
    %1005 = vmatprep.subr.mxu0 0.0
    %1006 = vmatpush1.msra.mxu0 0.0
    %1007 = vmatprep.subr.mxu0 0.0
    %1008 = vmatpush1.msra.mxu0 0.0
    %1009 = vmatprep.subr.mxu0 0.0
    %1010 = vmatpush1.msra.mxu0 0.0
    %1011 = vmatprep.subr.mxu0 0.0
    %1012 = vmatpush1.msra.mxu0 0.0
    %1013 = vmatprep.subr.mxu0 0.0
    %1014 = vmatpush1.msra.mxu0 0.0
    %1015 = vmatprep.subr.mxu0 0.0
    %1016 = vmatpush1.msra.mxu0 0.0
    %1017 = vmatprep.subr.mxu0 0.0
    %1018 = vmatpush1.msra.mxu0 0.0
    %1019 = vmatprep.subr.mxu0 0.0
    %1020 = vmatpush1.msra.mxu0 0.0
    %1021 = vmatprep.subr.mxu0 0.0
    %1022 = vmatpush1.msra.mxu0 0.0
    %1023 = vmatprep.subr.mxu0 0.0
    %1024 = vmatpush1.msra.mxu0 0.0
    %1025 = vmatprep.subr.mxu0 0.0
    %1026 = vmatpush1.msra.mxu0 0.0
    %1027 = vmatprep.subr.mxu0 0.0
    %1028 = vmatpush1.msra.mxu0 0.0
    %1029 = vmatprep.subr.mxu0 0.0
    %1030 = vmatpush1.msra.mxu0 0.0
    %1031 = vmatprep.subr.mxu0 0.0
    %1032 = vmatpush1.msra.mxu0 0.0
    %1033 = vmatprep.subr.mxu0 0.0
    %1034 = vmatpush1.msra.mxu0 0.0
    %1035 = vmatprep.subr.mxu0 0.0
    %1036 = vmatpush1.msra.mxu0 0.0
    %1037 = vmatprep.subr.mxu0 0.0
    %1038 = vmatpush1.msra.mxu0 0.0
    %1039 = vmatprep.subr.mxu0 0.0
    %1040 = vmatpush1.msra.mxu0 0.0
    %1041 = vmatprep.subr.mxu0 0.0
    %1042 = vmatpush1.msra.mxu0 0.0
    %1043 = vmatprep.subr.mxu0 0.0
    %1044 = vmatpush1.msra.mxu0 0.0
    %1045 = vmatprep.subr.mxu0 0.0
    %1046 = vmatpush1.msra.mxu0 0.0
    %1047 = vmatprep.subr.mxu0 0.0
    %1048 = vmatpush1.msra.mxu0 0.0
    %1049 = vmatprep.subr.mxu0 0.0
    %1050 = vmatpush1.msra.mxu0 0.0
    %1051 = vmatprep.subr.mxu0 0.0
    %1052 = vmatpush1.msra.mxu0 0.0
    %1053 = vmatprep.subr.mxu0 0.0
    %1054 = vmatpush1.msra.mxu0 0.0
    %1055 = vmatprep.mubr.f32.mxu0 0.0
    %1056 = vmatmul.mubr.f32.gmra.mrb[0].mxu0 %v986
    %v1057 = vpop.f32.mrb[0].mxu0
    %v1058 = vadd.f32 %v983, %v1057
    %v1059 = vpop.f32.mrb[0].mxu0
    %1060 = vmatprep.mubr.f32.mxu0 0.0
    %1061 = vmatmul.mubr.f32.gmra.mrb[0].mxu0 %v989
    %v1062 = vpop.f32.mrb[0].mxu0
    %v1063 = vadd.f32 %v983, %v1062
    %v1064 = vpop.f32.mrb[0].mxu0
    %1065 = vdwg.mxu0
    %v1066 = vadd.f32 %v24, %v1058
    %v1067 = vadd.f32 %v25, %v1063
    %v1068 = vsel %vm35, %v1066, 0.0
    %1069 = vadd.xlane.f32.xlu0 %v1068
    %v1070 = vpop.xlane.xlu0 %1069
    %v1071 = vsel %vm35, %v1067, 0.0
    %1072 = vadd.xlane.f32.xlu0 %v1071
    %v1073 = vpop.xlane.xlu0 %1072
    %v1074 = vrcp.pop 32.0
    %v1075 = vmul.f32 %v1070, %v1074
    %v1076 = vmul.f32 %v1073, %v1074
    %v1077 = vsub.f32 %v1066, %v1075
    %v1078 = vsub.f32 %v1067, %v1076
    %v1079 = vmul.f32 %v1077, %v1077
    %v1080 = vmul.f32 %v1078, %v1078
    %v1081 = vsel %vm35, %v1079, 0.0
    %1082 = vadd.xlane.f32.xlu0 %v1081
    %v1083 = vpop.xlane.xlu0 %1082
    %v1084 = vsel %vm35, %v1080, 0.0
    %1085 = vadd.xlane.f32.xlu0 %v1084
    %v1086 = vpop.xlane.xlu0 %1085
    %v1087 = vmul.f32 %v1083, %v1074
    %v1088 = vmul.f32 %v1086, %v1074
    %v1089 = vadd.f32 %v1087, 1e-05
    %v1090 = vadd.f32 %v1088, 1e-05
    %v1091 = vrsqrt.pop %v1089
    %v1092 = vrsqrt.pop %v1090
    %v1093 = vmul.f32 %v1077, %v1091
    %v1094 = vmul.f32 %v1078, %v1092
    %v1095 = vlaneseq
    %v1096 = vshrl.u32 %v1095, 7
    %v1097 = vsub.s32 2, %v1096
    %v1098 = vrot.slane %v26, %v1097
    %v1099 = vmul.f32 %v1093, %v1098
    %v1100 = vmul.f32 %v1094, %v1098
    %1102 = vrot.lane.b32.xlu0 %v1098, 96
    %v1103 = vpop.permute.xlu0 %1102
    %v1105 = vadd.f32 %v1099, %v1103
    %v1106 = vadd.f32 %v1100, %v1103
    %v1107 = vld [vmem:[%s3] sm:$0xff]
    %v1108 = vld [vmem:[%s3 + $0x8] sm:$0xff]
    %v1109 = vld [vmem:[%s3 + $0x10] sm:$0xff]
    %v1110 = vld [vmem:[%s3 + $0x18] sm:$0xff]
    %v1111 = vlaneseq
    %v1112 = vshrl.u32 %v1111, 7
    %v1113 = vsub.s32 1, %v1112
    %v1114 = vrot.slane %v26, %v1113
    %v1116 = vsel %vm35, %v1105, 0
    %v1119 = vsel %vm35, %v1106, 0
    %1121 = vmatprep.subr.mxu0 0.0
    %1122 = vmatpush1.msra.mxu0 %v1107
    %1123 = vmatprep.subr.mxu0 0.0
    %1124 = vmatpush1.msra.mxu0 %v1108
    %1125 = vmatprep.subr.mxu0 0.0
    %1126 = vmatpush1.msra.mxu0 %v1109
    %1127 = vmatprep.subr.mxu0 0.0
    %1128 = vmatpush1.msra.mxu0 %v1110
    %1129 = vmatprep.subr.mxu0 0.0
    %1130 = vmatpush1.msra.mxu0 0.0
    %1131 = vmatprep.subr.mxu0 0.0
    %1132 = vmatpush1.msra.mxu0 0.0
    %1133 = vmatprep.subr.mxu0 0.0
    %1134 = vmatpush1.msra.mxu0 0.0
    %1135 = vmatprep.subr.mxu0 0.0
    %1136 = vmatpush1.msra.mxu0 0.0
    %1137 = vmatprep.subr.mxu0 0.0
    %1138 = vmatpush1.msra.mxu0 0.0
    %1139 = vmatprep.subr.mxu0 0.0
    %1140 = vmatpush1.msra.mxu0 0.0
    %1141 = vmatprep.subr.mxu0 0.0
    %1142 = vmatpush1.msra.mxu0 0.0
    %1143 = vmatprep.subr.mxu0 0.0
    %1144 = vmatpush1.msra.mxu0 0.0
    %1145 = vmatprep.subr.mxu0 0.0
    %1146 = vmatpush1.msra.mxu0 0.0
    %1147 = vmatprep.subr.mxu0 0.0
    %1148 = vmatpush1.msra.mxu0 0.0
    %1149 = vmatprep.subr.mxu0 0.0
    %1150 = vmatpush1.msra.mxu0 0.0
    %1151 = vmatprep.subr.mxu0 0.0
    %1152 = vmatpush1.msra.mxu0 0.0
    %1153 = vmatprep.subr.mxu0 0.0
    %1154 = vmatpush1.msra.mxu0 0.0
    %1155 = vmatprep.subr.mxu0 0.0
    %1156 = vmatpush1.msra.mxu0 0.0
    %1157 = vmatprep.subr.mxu0 0.0
    %1158 = vmatpush1.msra.mxu0 0.0
    %1159 = vmatprep.subr.mxu0 0.0
    %1160 = vmatpush1.msra.mxu0 0.0
    %1161 = vmatprep.subr.mxu0 0.0
    %1162 = vmatpush1.msra.mxu0 0.0
    %1163 = vmatprep.subr.mxu0 0.0
    %1164 = vmatpush1.msra.mxu0 0.0
    %1165 = vmatprep.subr.mxu0 0.0
    %1166 = vmatpush1.msra.mxu0 0.0
    %1167 = vmatprep.subr.mxu0 0.0
    %1168 = vmatpush1.msra.mxu0 0.0
    %1169 = vmatprep.subr.mxu0 0.0
    %1170 = vmatpush1.msra.mxu0 0.0
    %1171 = vmatprep.subr.mxu0 0.0
    %1172 = vmatpush1.msra.mxu0 0.0
    %1173 = vmatprep.subr.mxu0 0.0
    %1174 = vmatpush1.msra.mxu0 0.0
    %1175 = vmatprep.subr.mxu0 0.0
    %1176 = vmatpush1.msra.mxu0 0.0
    %1177 = vmatprep.subr.mxu0 0.0
    %1178 = vmatpush1.msra.mxu0 0.0
    %1179 = vmatprep.subr.mxu0 0.0
    %1180 = vmatpush1.msra.mxu0 0.0
    %1181 = vmatprep.subr.mxu0 0.0
    %1182 = vmatpush1.msra.mxu0 0.0
    %1183 = vmatprep.subr.mxu0 0.0
    %1184 = vmatpush1.msra.mxu0 0.0
    %1185 = vmatprep.mubr.f32.mxu0 0.0
    %1186 = vmatmul.mubr.f32.gmra.mrb[0].mxu0 %v1116
    %v1187 = vpop.f32.mrb[0].mxu0
    %v1188 = vadd.f32 %v1114, %v1187
    %v1189 = vpop.f32.mrb[0].mxu0
    %1190 = vmatprep.mubr.f32.mxu0 0.0
    %1191 = vmatmul.mubr.f32.gmra.mrb[0].mxu0 %v1119
    %v1192 = vpop.f32.mrb[0].mxu0
    %v1193 = vadd.f32 %v1114, %v1192
    %v1194 = vpop.f32.mrb[0].mxu0
    %1195 = vdwg.mxu0
    %v1196 = vmax.f32 %v1188, 0.0
    %v1197 = vmax.f32 %v1193, 0.0
    %v1198 = vld [vmem:[%s4] sm:$0xff]
    %v1199 = vld [vmem:[%s4 + $0x8] sm:$0xff]
    %v1200 = vld [vmem:[%s4 + $0x10] sm:$0xff]
    %v1201 = vld [vmem:[%s4 + $0x18] sm:$0xff]
    %v1202 = vld [vmem:[%s4 + $0x20] sm:$0xff]
    %v1203 = vld [vmem:[%s4 + $0x28] sm:$0xff]
    %v1204 = vld [vmem:[%s4 + $0x30] sm:$0xff]
    %v1205 = vld [vmem:[%s4 + $0x38] sm:$0xff]
    %1207 = vrot.lane.b32.xlu0 %v1114, 64
    %v1208 = vpop.permute.xlu0 %1207
    %vm1210 = vcmask 523264
    %v1212 = vsel %vm1210, %v1196, 0
    %v1215 = vsel %vm1210, %v1197, 0
    %1217 = vmatprep.subr.mxu0 0.0
    %1218 = vmatpush1.msra.mxu0 %v1198
    %1219 = vmatprep.subr.mxu0 0.0
    %1220 = vmatpush1.msra.mxu0 %v1199
    %1221 = vmatprep.subr.mxu0 0.0
    %1222 = vmatpush1.msra.mxu0 %v1200
    %1223 = vmatprep.subr.mxu0 0.0
    %1224 = vmatpush1.msra.mxu0 %v1201
    %1225 = vmatprep.subr.mxu0 0.0
    %1226 = vmatpush1.msra.mxu0 %v1202
    %1227 = vmatprep.subr.mxu0 0.0
    %1228 = vmatpush1.msra.mxu0 %v1203
    %1229 = vmatprep.subr.mxu0 0.0
    %1230 = vmatpush1.msra.mxu0 %v1204
    %1231 = vmatprep.subr.mxu0 0.0
    %1232 = vmatpush1.msra.mxu0 %v1205
    %1233 = vmatprep.subr.mxu0 0.0
    %1234 = vmatpush1.msra.mxu0 0.0
    %1235 = vmatprep.subr.mxu0 0.0
    %1236 = vmatpush1.msra.mxu0 0.0
    %1237 = vmatprep.subr.mxu0 0.0
    %1238 = vmatpush1.msra.mxu0 0.0
    %1239 = vmatprep.subr.mxu0 0.0
    %1240 = vmatpush1.msra.mxu0 0.0
    %1241 = vmatprep.subr.mxu0 0.0
    %1242 = vmatpush1.msra.mxu0 0.0
    %1243 = vmatprep.subr.mxu0 0.0
    %1244 = vmatpush1.msra.mxu0 0.0
    %1245 = vmatprep.subr.mxu0 0.0
    %1246 = vmatpush1.msra.mxu0 0.0
    %1247 = vmatprep.subr.mxu0 0.0
    %1248 = vmatpush1.msra.mxu0 0.0
    %1249 = vmatprep.subr.mxu0 0.0
    %1250 = vmatpush1.msra.mxu0 0.0
    %1251 = vmatprep.subr.mxu0 0.0
    %1252 = vmatpush1.msra.mxu0 0.0
    %1253 = vmatprep.subr.mxu0 0.0
    %1254 = vmatpush1.msra.mxu0 0.0
    %1255 = vmatprep.subr.mxu0 0.0
    %1256 = vmatpush1.msra.mxu0 0.0
    %1257 = vmatprep.subr.mxu0 0.0
    %1258 = vmatpush1.msra.mxu0 0.0
    %1259 = vmatprep.subr.mxu0 0.0
    %1260 = vmatpush1.msra.mxu0 0.0
    %1261 = vmatprep.subr.mxu0 0.0
    %1262 = vmatpush1.msra.mxu0 0.0
    %1263 = vmatprep.subr.mxu0 0.0
    %1264 = vmatpush1.msra.mxu0 0.0
    %1265 = vmatprep.subr.mxu0 0.0
    %1266 = vmatpush1.msra.mxu0 0.0
    %1267 = vmatprep.subr.mxu0 0.0
    %1268 = vmatpush1.msra.mxu0 0.0
    %1269 = vmatprep.subr.mxu0 0.0
    %1270 = vmatpush1.msra.mxu0 0.0
    %1271 = vmatprep.subr.mxu0 0.0
    %1272 = vmatpush1.msra.mxu0 0.0
    %1273 = vmatprep.subr.mxu0 0.0
    %1274 = vmatpush1.msra.mxu0 0.0
    %1275 = vmatprep.subr.mxu0 0.0
    %1276 = vmatpush1.msra.mxu0 0.0
    %1277 = vmatprep.subr.mxu0 0.0
    %1278 = vmatpush1.msra.mxu0 0.0
    %1279 = vmatprep.subr.mxu0 0.0
    %1280 = vmatpush1.msra.mxu0 0.0
    %1281 = vmatprep.mubr.f32.mxu0 0.0
    %1282 = vmatmul.mubr.f32.gmra.mrb[0].mxu0 %v1212
    %v1283 = vpop.f32.mrb[0].mxu0
    %v1284 = vadd.f32 %v1208, %v1283
    %v1285 = vpop.f32.mrb[0].mxu0
    %1286 = vmatprep.mubr.f32.mxu0 0.0
    %1287 = vmatmul.mubr.f32.gmra.mrb[0].mxu0 %v1215
    %v1288 = vpop.f32.mrb[0].mxu0
    %v1289 = vadd.f32 %v1208, %v1288
    %v1290 = vpop.f32.mrb[0].mxu0
    %1291 = vdwg.mxu0
    %v1292 = vadd.f32 %v1105, %v1284
    %v1293 = vadd.f32 %v1106, %v1289
    %v1294 = vsel %vm35, %v1292, 0.0
    %1295 = vadd.xlane.f32.xlu0 %v1294
    %v1296 = vpop.xlane.xlu0 %1295
    %v1297 = vsel %vm35, %v1293, 0.0
    %1298 = vadd.xlane.f32.xlu0 %v1297
    %v1299 = vpop.xlane.xlu0 %1298
    %v1300 = vmul.f32 %v1296, %v1074
    %v1301 = vmul.f32 %v1299, %v1074
    %v1302 = vsub.f32 %v1292, %v1300
    %v1303 = vsub.f32 %v1293, %v1301
    %v1304 = vmul.f32 %v1302, %v1302
    %v1305 = vmul.f32 %v1303, %v1303
    %v1306 = vsel %vm35, %v1304, 0.0
    %1307 = vadd.xlane.f32.xlu0 %v1306
    %v1308 = vpop.xlane.xlu0 %1307
    %v1309 = vsel %vm35, %v1305, 0.0
    %1310 = vadd.xlane.f32.xlu0 %v1309
    %v1311 = vpop.xlane.xlu0 %1310
    %v1312 = vmul.f32 %v1308, %v1074
    %v1313 = vmul.f32 %v1311, %v1074
    %v1314 = vadd.f32 %v1312, 1e-05
    %v1315 = vadd.f32 %v1313, 1e-05
    %v1316 = vrsqrt.pop %v1314
    %v1317 = vrsqrt.pop %v1315
    %v1318 = vmul.f32 %v1302, %v1316
    %v1319 = vmul.f32 %v1303, %v1317
    %1320 = vrot.lane.b32.xlu0 %v1098, 64
    %v1321 = vpop.permute.xlu0 %1320
    %v1323 = vmul.f32 %v1318, %v1321
    %v1324 = vmul.f32 %v1319, %v1321
    %1325 = vrot.lane.b32.xlu0 %v1098, 32
    %v1326 = vpop.permute.xlu0 %1325
    %v1328 = vadd.f32 %v1323, %v1326
    %v1329 = vadd.f32 %v1324, %v1326
    %v1330 = vld [vmem:[%s1] sm:$0xff]
    %v1331 = vld [vmem:[%s1 + $0x8] sm:$0xff]
    %v1332 = vmul.f32 %v1328, %v1330
    %v1333 = vmul.f32 %v1329, %v1331
    %1334 = vst.msk [vmem:[#allocation2] sm:$0xff] %vm35, %v1332
    %1335 = vst.msk [vmem:[#allocation2 + $0x8] sm:$0xff] %vm35, %v1333
    // Predicated region
    $region26: #{masked_tenc_layer.1} parent=1 // pred_check
      _
    $region27: #{masked_tenc_layer.1} parent=1 // pred_check_branch
      %1337 = sbr.rel (0) target = $region29
    $region28: #{masked_tenc_layer.1} parent=1 // pred_region
      %s1339 = ssub.s32 256, 256
      %1340 = vsyncadd [#allocation3], %s1339
      %s1341 = sshll.u32 [#allocation2], 4
      %s1342 = int_to_ptr.vmem [resolvable:$true] %s1341
      %1347 = dma.vmem_to_hbm [thread:$0]  %s1342, 256, %s6, [#allocation3], 128, 128, 8
    $region29: #{masked_tenc_layer.1} parent=1 // pred_fallthru
      _
    // Predicated region
    $region30: #{masked_tenc_layer.1} parent=1 // pred_check
      _
    $region31: #{masked_tenc_layer.1} parent=1 // pred_check_branch
      %1349 = sbr.rel (0) target = $region33
    $region32: #{masked_tenc_layer.1} parent=1 // pred_region
      %1350 = dma.done [#allocation3], 256
    $region33: #{masked_tenc_layer.1} parent=1 // pred_fallthru
      _
    %1351 = vsyncpa [#allocation3], 1

</llo_original>
